<compile_context>
chip_gen: v5e
topology: v5e:2x2
jax: 0.10.0
libtpu: 0.0.40
codegen_flags: <defaults>
</compile_context>

<pallas_src>
import functools

import numpy as np

import jax
import jax.numpy as jnp
from jax.experimental import pallas as pl
from jax.experimental.pallas import tpu as pltpu

KSIZE = 7                       # kernel_size (must be 3 or 7, as in the module)
PAD = 3 if KSIZE == 7 else 1
LANE = 128


def _round_up(x, m):
    return ((x + m - 1) // m) * m


def _vmem_capacity_bytes():
    try:
        info = pltpu.get_tpu_info()
        for name in ("vmem_capacity_bytes", "vmem_bytes", "vmem_size_bytes"):
            v = getattr(info, name, None)
            if v:
                return int(v)
    except Exception:
        pass
    return 64 * 1024 * 1024      # conservative (v7x-sized) fallback


def _pick_batch_block(n, c, hw, itemsize, vmem_limit):
    """Largest batch block nb that divides N, fits the double-buffered in+out
    footprint inside the VMEM limit, and (when possible) leaves >= 2 and an
    even number of grid steps so both TensorCores on a v7x get work."""
    per_sample = c * hw * itemsize
    budget = max(per_sample, (vmem_limit - (2 << 20)) // 5)
    cands = [nb for nb in range(1, n + 1)
             if n % nb == 0 and nb * per_sample <= budget]
    if not cands:
        # TODO(synk): add a (batch, C-block) grid fallback (C axis "arbitrary",
        # gate accumulated in scratch) for per-sample footprints > VMEM budget.
        cands = [1]

    def score(nb):
        steps = n // nb
        return ((steps >= 2) or n == 1, (steps % 2 == 0) or n == 1, nb)

    return max(cands, key=score)


def _pick_c_chunk(c, hw):
    """Largest divisor of C keeping ~3-4 live (c_chunk, HW) f32 values under
    ~half the 64-vreg file; prefer multiples of 8 (full-width sublane tiles)."""
    limit = max(1, 8192 // max(1, hw))
    divs = [d for d in range(1, c + 1) if c % d == 0 and d <= limit]
    if not divs:
        return 1
    mult8 = [d for d in divs if d % 8 == 0]
    return max(mult8) if mult8 else max(divs)
    # TODO(synk): for very large HW (>= 2048) add an HW (lane) tiling loop in
    # the reduce/apply passes instead of shrinking c_chunk below 8.


def _spatial_attention_kernel(wcol_ref, mask_ref, x_ref, o_ref, buf_ref,
                              gate_ref, *, width, hw, lpad, buf_len, ksize,
                              pad, nb, c_chunk, n_chunks, unroll):
    """One batch block of nb samples.

    wcol_ref: (2*nb, K*K) f32 per-tap weight columns; rows [0:nb) carry the
              mean-channel weight (already scaled by 1/C), rows [nb:2nb) the
              max-channel weight.
    mask_ref: (K, HW) f32 column-validity masks (one row per kw tap).
    x_ref   : (nb, C, HW) lane-dense input block in VMEM.
    o_ref   : (nb, C, HW) output block.
    buf_ref : (2*nb, BUF_LEN) f32 scratch holding the flat [sum; max] maps with
              `lpad` zero lanes each side (the conv's zero row-padding).
    gate_ref: (nb, HW) f32 scratch for sigmoid(conv) gates.
    """
    f32 = jnp.float32

    # Keep the zero borders valid every step (two cheap lane-aligned stores;
    # NOT gated on program_id == 0: with a "parallel" grid axis each
    # TensorCore owns its own scratch and only one of them sees step 0).
    buf_ref[:, :lpad] = jnp.zeros((2 * nb, lpad), f32)
    buf_ref[:, lpad + hw:] = jnp.zeros((2 * nb, buf_len - lpad - hw), f32)

    # ---- Phase 1: channel sum / max (dim=1 in the module), per sample ----
    def reduce_sample(i, carry):
        def chunk_body(j, acc):
            s_acc, m_acc = acc
            c0 = pl.multiple_of(j * c_chunk, c_chunk)
            chunk = x_ref[i, pl.ds(c0, c_chunk), :].astype(f32)
            return s_acc + chunk, jnp.maximum(m_acc, chunk)

        s_acc, m_acc = jax.lax.fori_loop(
            0, n_chunks, chunk_body,
            (jnp.zeros((c_chunk, hw), f32),
             jnp.full((c_chunk, hw), -jnp.inf, f32)),
            unroll=unroll)
        # One cross-sublane reduce per sample, after the elementwise loop.
        # 1/C is folded into the mean rows of wcol, so the raw sum is stored.
        # TODO(synk): for large C, route the sum through the idle MXU via
        # jnp.dot(ones, chunk) and keep only the max on the VPU.
        buf_ref[pl.ds(i, 1), pl.ds(lpad, hw)] = jnp.sum(s_acc, axis=0,
                                                        keepdims=True)
        buf_ref[pl.ds(nb + i, 1), pl.ds(lpad, hw)] = jnp.max(m_acc, axis=0,
                                                             keepdims=True)
        return carry

    jax.lax.fori_loop(0, nb, reduce_sample, 0)

    # ---- Phase 2: 2-in/1-out KxK conv, sublane-batched across samples ----
    # 49 static rolls of the whole (2*nb, buf_len) buffer per grid step
    # (shared by every sample's sum & max rows), per-sublane weight columns,
    # per-kw column masks, one pairwise sublane reduce.
    b_all = buf_ref[...]                                     # (2*nb, BUF_LEN)
    acc = jnp.zeros((2 * nb, hw), f32)
    for kw in range(ksize):
        part = jnp.zeros((2 * nb, hw), f32)
        for kh in range(ksize):
            # tap at flat offset s: out[p] += w * buf[p + s]
            s = lpad + (kh - pad) * width + (kw - pad)
            rolled = pltpu.roll(b_all, shift=(buf_len - s) % buf_len, axis=1)
            t = kh * ksize + kw
            wc = wcol_ref[:, t:t + 1]                        # (2*nb, 1)
            part = part + rolled[:, :hw] * wc
        # Column-validity mask read lazily, one row per kw.
        acc = acc + part * mask_ref[kw:kw + 1, :]
    # Sum the mean-half and max-half contributions, then the sigmoid gate.
    gate_ref[...] = jax.nn.sigmoid(acc[:nb, :] + acc[nb:, :])   # (nb, HW) f32

    # ---- Phase 3: x * sigmoid(y).expand_as(x): chunked, lane-dense stores ----
    def apply_sample(i, carry):
        g_row = gate_ref[pl.ds(i, 1), :]                     # (1, HW) f32
        gate_b = jnp.broadcast_to(g_row, (c_chunk, hw))      # hoisted broadcast

        def chunk_body(j, c):
            c0 = pl.multiple_of(j * c_chunk, c_chunk)
            xc = x_ref[i, pl.ds(c0, c_chunk), :]
            o_ref[i, pl.ds(c0, c_chunk), :] = (xc * gate_b).astype(o_ref.dtype)
            return c

        jax.lax.fori_loop(0, n_chunks, chunk_body, 0, unroll=unroll)
        return carry

    jax.lax.fori_loop(0, nb, apply_sample, 0)


def spatial_attention(x, conv_w):
    """x: (N, C, H, W); conv_w: (1, 2, K, K) (OIHW, bias-free). Returns (N, C, H, W)."""
    N, C, H, W = x.shape
    assert conv_w.shape == (1, 2, KSIZE, KSIZE)
    HW = H * W
    # TODO(synk): support H*W not a multiple of 128 by zero-padding the
    # flattened spatial dim (tail reduces to zeros, sliced off afterwards).
    assert HW % LANE == 0, "H*W must be a multiple of 128 for the lane-dense layout"

    lpad = _round_up(max(PAD * (W + 1), 1), LANE)            # flat row padding, lane aligned
    buf_len = 2 * lpad + HW

    vmem_cap = _vmem_capacity_bytes()
    vmem_limit = int(min(vmem_cap * 3 // 4, 96 * 1024 * 1024))
    nb = _pick_batch_block(N, C, HW, x.dtype.itemsize, vmem_limit)
    c_chunk = _pick_c_chunk(C, HW)
    n_chunks = C // c_chunk
    unroll = min(n_chunks, 4)

    # Per-tap weight columns: rows [0:nb) mean weights (with 1/C folded in),
    # rows [nb:2nb) max weights.  Shape (2*nb, K*K), f32, kept in VMEM.
    kk = KSIZE * KSIZE
    w_mean = conv_w[0, 0].reshape(-1).astype(jnp.float32) / jnp.float32(C)
    w_max = conv_w[0, 1].reshape(-1).astype(jnp.float32)
    wcol = jnp.concatenate([jnp.tile(w_mean[None, :], (nb, 1)),
                            jnp.tile(w_max[None, :], (nb, 1))], axis=0)

    # Column-validity masks for the flattened conv (host-built, tiny constant).
    col = np.arange(HW) % W
    masks_np = np.stack(
        [((col + kw - PAD >= 0) & (col + kw - PAD < W)).astype(np.float32)
         for kw in range(KSIZE)])                            # (K, HW)
    col_masks = jnp.asarray(masks_np)

    x_flat = x.reshape(N, C, HW)                             # contiguous -> free reshape

    kernel = functools.partial(
        _spatial_attention_kernel,
        width=W, hw=HW, lpad=lpad, buf_len=buf_len, ksize=KSIZE, pad=PAD,
        nb=nb, c_chunk=c_chunk, n_chunks=n_chunks, unroll=unroll)

    out_flat = pl.pallas_call(
        kernel,
        out_shape=jax.ShapeDtypeStruct((N, C, HW), x.dtype),
        grid_spec=pltpu.PrefetchScalarGridSpec(
            num_scalar_prefetch=0,
            grid=(N // nb,),
            in_specs=[
                pl.BlockSpec((2 * nb, kk), lambda n: (0, 0)),        # weight columns
                pl.BlockSpec((KSIZE, HW), lambda n: (0, 0)),         # column masks
                pl.BlockSpec((nb, C, HW), lambda n: (n, 0, 0)),      # x (lane-dense)
            ],
            out_specs=pl.BlockSpec((nb, C, HW), lambda n: (n, 0, 0)),
            scratch_shapes=[
                pltpu.VMEM((2 * nb, buf_len), jnp.float32),          # flat [sum; max] maps
                pltpu.VMEM((nb, HW), jnp.float32),                   # per-sample gates
            ],
        ),
        compiler_params=pltpu.CompilerParams(
            dimension_semantics=("parallel",),
            vmem_limit_bytes=vmem_limit),
    )(wcol, col_masks, x_flat)

    return out_flat.reshape(N, C, H, W)


def spatial_attention_reference(x, conv_w):
    """Pure-JAX reference mirroring the PyTorch forward."""
    avg = jnp.mean(x, axis=1, keepdims=True)
    mx = jnp.max(x, axis=1, keepdims=True)
    y = jnp.concatenate([avg, mx], axis=1)
    y = jax.lax.conv_general_dilated(
        y, conv_w, window_strides=(1, 1),
        padding=((PAD, PAD), (PAD, PAD)),
        dimension_numbers=("NCHW", "OIHW", "NCHW"))
    return x * jax.nn.sigmoid(y)


if __name__ == "__main__":
    key = jax.random.PRNGKey(0)
    kx, kwk = jax.random.split(key)

    N, C, H, W = 2, 4, 16, 16
    x = jax.random.normal(kx, (N, C, H, W), dtype=jnp.float32)

    # Deterministic Conv2d(2, 1, 7, bias=False) weight init (kaiming-uniform
    # style bound, like PyTorch's default): shape OIHW = (1, 2, 7, 7).
    fan_in = 2 * KSIZE * KSIZE
    bound = 1.0 / (fan_in ** 0.5)
    conv_w = jax.random.uniform(
        kwk, (1, 2, KSIZE, KSIZE), dtype=jnp.float32, minval=-bound, maxval=bound)

    out = spatial_attention(x, conv_w)
    out = jax.block_until_ready(out)

    ref = spatial_attention_reference(x, conv_w)
    assert out.shape == x.shape and out.dtype == x.dtype
    assert jnp.allclose(out, ref, atol=1e-5, rtol=1e-5), "mismatch vs reference"

    print("KERNEL_OK")
</pallas_src>

<mosaic_0001>
module attributes {stable_mosaic.version = 11 : i64} {
  func.func @_spatial_attention_kernel(%arg0: i32, %arg1: memref<2x49xf32, #tpu.memory_space<vmem>>, %arg2: memref<7x256xf32, #tpu.memory_space<vmem>>, %arg3: memref<1x4x256xf32, #tpu.memory_space<vmem>>, %arg4: memref<1x4x256xf32, #tpu.memory_space<vmem>>, %arg5: memref<2x512xf32, #tpu.memory_space<vmem>>, %arg6: memref<1x256xf32, #tpu.memory_space<vmem>>) attributes {dimension_semantics = [#tpu.dimension_semantics<parallel>], iteration_bounds = array<i64: 2>, scalar_prefetch = 0 : i64, scratch_operands = 2 : i64, tpu.core_type = #tpu.core_type<tc>, window_params = [{pipeline_mode = #tpu.pipeline_mode<synchronous>, transform_indices = @transform_0, window_bounds = array<i64: 2, 49>}, {pipeline_mode = #tpu.pipeline_mode<synchronous>, transform_indices = @transform_1, window_bounds = array<i64: 7, 256>}, {transform_indices = @transform_2, window_bounds = array<i64: 1, 4, 256>}, {transform_indices = @transform_3, window_bounds = array<i64: 1, 4, 256>}]} {
    %cst = arith.constant 0.000000e+00 : f32
    %0 = vector.broadcast %cst : f32 to vector<2x128xf32>
    %c0 = arith.constant 0 : index
    %c0_0 = arith.constant 0 : index
    %1 = vector.load %arg5[%c0, %c0_0] : memref<2x512xf32, #tpu.memory_space<vmem>>, vector<2x128xf32>
    tpu.vector_store %arg5[%c0, %c0_0], %0 {strides = array<i32>} : memref<2x512xf32, #tpu.memory_space<vmem>>, vector<2x128xf32>,
    %cst_1 = arith.constant 0.000000e+00 : f32
    %2 = vector.broadcast %cst_1 : f32 to vector<2x128xf32>
    %c0_2 = arith.constant 0 : index
    %c384 = arith.constant 384 : index
    %3 = vector.load %arg5[%c0_2, %c384] : memref<2x512xf32, #tpu.memory_space<vmem>>, vector<2x128xf32>
    tpu.vector_store %arg5[%c0_2, %c384], %2 {strides = array<i32>} : memref<2x512xf32, #tpu.memory_space<vmem>>, vector<2x128xf32>,
    %c0_i32 = arith.constant 0 : i32
    %cst_3 = arith.constant 0.000000e+00 : f32
    %4 = vector.broadcast %cst_3 : f32 to vector<4x256xf32>
    %cst_4 = arith.constant 0xFF800000 : f32
    %5 = vector.broadcast %cst_4 : f32 to vector<4x256xf32>
    %c0_i32_5 = arith.constant 0 : i32
    %c4_i32 = arith.constant 4 : i32
    %6 = arith.muli %c0_i32_5, %c4_i32 : i32
    %7 = tpu.assume_multiple %6, 4 : i32
    %8 = arith.index_cast %c0_i32 : i32 to index
    %9 = arith.index_cast %7 : i32 to index
    %c0_6 = arith.constant 0 : index
    %10 = vector.load %arg3[%8, %9, %c0_6] : memref<1x4x256xf32, #tpu.memory_space<vmem>>, vector<1x4x256xf32>
    %11 = vector.shape_cast %10 : vector<1x4x256xf32> to vector<4x256xf32>
    %12 = arith.addf %4, %11 : vector<4x256xf32>
    %13 = arith.maximumf %5, %11 : vector<4x256xf32>
    %c1_i32 = arith.constant 1 : i32
    %cst_7 = arith.constant dense<0.000000e+00> : vector<256xf32>
    %14 = vector.multi_reduction <add>, %12, %cst_7 [0] : vector<4x256xf32> to vector<256xf32>
    %15 = vector.shape_cast %14 : vector<256xf32> to vector<1x256xf32>
    %16 = arith.index_cast %c0_i32 : i32 to index
    %c128 = arith.constant 128 : index
    %17 = vector.load %arg5[%16, %c128] : memref<2x512xf32, #tpu.memory_space<vmem>>, vector<1x256xf32>
    tpu.vector_store %arg5[%16, %c128], %15 {strides = array<i32>} : memref<2x512xf32, #tpu.memory_space<vmem>>, vector<1x256xf32>,
    %cst_8 = arith.constant dense<0xFF800000> : vector<256xf32>
    %18 = vector.multi_reduction <maximumf>, %13, %cst_8 [0] : vector<4x256xf32> to vector<256xf32>
    %19 = vector.shape_cast %18 : vector<256xf32> to vector<1x256xf32>
    %c1_i32_9 = arith.constant 1 : i32
    %20 = arith.addi %c1_i32_9, %c0_i32 : i32
    %21 = arith.index_cast %20 : i32 to index
    %c128_10 = arith.constant 128 : index
    %22 = vector.load %arg5[%21, %c128_10] : memref<2x512xf32, #tpu.memory_space<vmem>>, vector<1x256xf32>
    tpu.vector_store %arg5[%21, %c128_10], %19 {strides = array<i32>} : memref<2x512xf32, #tpu.memory_space<vmem>>, vector<1x256xf32>,
    %c1_i32_11 = arith.constant 1 : i32
    %c0_12 = arith.constant 0 : index
    %c0_13 = arith.constant 0 : index
    %23 = vector.load %arg5[%c0_12, %c0_13] : memref<2x512xf32, #tpu.memory_space<vmem>>, vector<2x512xf32>
    %cst_14 = arith.constant 0.000000e+00 : f32
    %24 = vector.broadcast %cst_14 : f32 to vector<2x256xf32>
    %cst_15 = arith.constant 0.000000e+00 : f32
    %25 = vector.broadcast %cst_15 : f32 to vector<2x256xf32>
    %c435_i32 = arith.constant 435 : i32
    %26 = tpu.dynamic_rotate %23 by %c435_i32 dim 1 : vector<2x512xf32>, i32 -> vector<2x512xf32>
    %c0_16 = arith.constant 0 : index
    %c0_17 = arith.constant 0 : index
    %27 = vector.load %arg1[%c0_16, %c0_17] : memref<2x49xf32, #tpu.memory_space<vmem>>, vector<2x1xf32>
    %28 = vector.extract_strided_slice %26 {offsets = [0, 0], sizes = [2, 256], strides = [1, 1]} : vector<2x512xf32> to vector<2x256xf32>
    %29 = vector.broadcast %27 : vector<2x1xf32> to vector<2x256xf32>
    %30 = arith.mulf %28, %29 : vector<2x256xf32>
    %31 = arith.addf %25, %30 : vector<2x256xf32>
    %c419_i32 = arith.constant 419 : i32
    %32 = tpu.dynamic_rotate %23 by %c419_i32 dim 1 : vector<2x512xf32>, i32 -> vector<2x512xf32>
    %c0_18 = arith.constant 0 : index
    %c7 = arith.constant 7 : index
    %33 = vector.load %arg1[%c0_18, %c7] : memref<2x49xf32, #tpu.memory_space<vmem>>, vector<2x1xf32>
    %34 = vector.extract_strided_slice %32 {offsets = [0, 0], sizes = [2, 256], strides = [1, 1]} : vector<2x512xf32> to vector<2x256xf32>
    %35 = vector.broadcast %33 : vector<2x1xf32> to vector<2x256xf32>
    %36 = arith.mulf %34, %35 : vector<2x256xf32>
    %37 = arith.addf %31, %36 : vector<2x256xf32>
    %c403_i32 = arith.constant 403 : i32
    %38 = tpu.dynamic_rotate %23 by %c403_i32 dim 1 : vector<2x512xf32>, i32 -> vector<2x512xf32>
    %c0_19 = arith.constant 0 : index
    %c14 = arith.constant 14 : index
    %39 = vector.load %arg1[%c0_19, %c14] : memref<2x49xf32, #tpu.memory_space<vmem>>, vector<2x1xf32>
    %40 = vector.extract_strided_slice %38 {offsets = [0, 0], sizes = [2, 256], strides = [1, 1]} : vector<2x512xf32> to vector<2x256xf32>
    %41 = vector.broadcast %39 : vector<2x1xf32> to vector<2x256xf32>
    %42 = arith.mulf %40, %41 : vector<2x256xf32>
    %43 = arith.addf %37, %42 : vector<2x256xf32>
    %c387_i32 = arith.constant 387 : i32
    %44 = tpu.dynamic_rotate %23 by %c387_i32 dim 1 : vector<2x512xf32>, i32 -> vector<2x512xf32>
    %c0_20 = arith.constant 0 : index
    %c21 = arith.constant 21 : index
    %45 = vector.load %arg1[%c0_20, %c21] : memref<2x49xf32, #tpu.memory_space<vmem>>, vector<2x1xf32>
    %46 = vector.extract_strided_slice %44 {offsets = [0, 0], sizes = [2, 256], strides = [1, 1]} : vector<2x512xf32> to vector<2x256xf32>
    %47 = vector.broadcast %45 : vector<2x1xf32> to vector<2x256xf32>
    %48 = arith.mulf %46, %47 : vector<2x256xf32>
    %49 = arith.addf %43, %48 : vector<2x256xf32>
    %c371_i32 = arith.constant 371 : i32
    %50 = tpu.dynamic_rotate %23 by %c371_i32 dim 1 : vector<2x512xf32>, i32 -> vector<2x512xf32>
    %c0_21 = arith.constant 0 : index
    %c28 = arith.constant 28 : index
    %51 = vector.load %arg1[%c0_21, %c28] : memref<2x49xf32, #tpu.memory_space<vmem>>, vector<2x1xf32>
    %52 = vector.extract_strided_slice %50 {offsets = [0, 0], sizes = [2, 256], strides = [1, 1]} : vector<2x512xf32> to vector<2x256xf32>
    %53 = vector.broadcast %51 : vector<2x1xf32> to vector<2x256xf32>
    %54 = arith.mulf %52, %53 : vector<2x256xf32>
    %55 = arith.addf %49, %54 : vector<2x256xf32>
    %c355_i32 = arith.constant 355 : i32
    %56 = tpu.dynamic_rotate %23 by %c355_i32 dim 1 : vector<2x512xf32>, i32 -> vector<2x512xf32>
    %c0_22 = arith.constant 0 : index
    %c35 = arith.constant 35 : index
    %57 = vector.load %arg1[%c0_22, %c35] : memref<2x49xf32, #tpu.memory_space<vmem>>, vector<2x1xf32>
    %58 = vector.extract_strided_slice %56 {offsets = [0, 0], sizes = [2, 256], strides = [1, 1]} : vector<2x512xf32> to vector<2x256xf32>
    %59 = vector.broadcast %57 : vector<2x1xf32> to vector<2x256xf32>
    %60 = arith.mulf %58, %59 : vector<2x256xf32>
    %61 = arith.addf %55, %60 : vector<2x256xf32>
    %c339_i32 = arith.constant 339 : i32
    %62 = tpu.dynamic_rotate %23 by %c339_i32 dim 1 : vector<2x512xf32>, i32 -> vector<2x512xf32>
    %c0_23 = arith.constant 0 : index
    %c42 = arith.constant 42 : index
    %63 = vector.load %arg1[%c0_23, %c42] : memref<2x49xf32, #tpu.memory_space<vmem>>, vector<2x1xf32>
    %64 = vector.extract_strided_slice %62 {offsets = [0, 0], sizes = [2, 256], strides = [1, 1]} : vector<2x512xf32> to vector<2x256xf32>
    %65 = vector.broadcast %63 : vector<2x1xf32> to vector<2x256xf32>
    %66 = arith.mulf %64, %65 : vector<2x256xf32>
    %67 = arith.addf %61, %66 : vector<2x256xf32>
    %c0_24 = arith.constant 0 : index
    %c0_25 = arith.constant 0 : index
    %68 = vector.load %arg2[%c0_24, %c0_25] : memref<7x256xf32, #tpu.memory_space<vmem>>, vector<1x256xf32>
    %69 = vector.broadcast %68 : vector<1x256xf32> to vector<2x256xf32>
    %70 = arith.mulf %67, %69 : vector<2x256xf32>
    %71 = arith.addf %24, %70 : vector<2x256xf32>
    %cst_26 = arith.constant 0.000000e+00 : f32
    %72 = vector.broadcast %cst_26 : f32 to vector<2x256xf32>
    %c434_i32 = arith.constant 434 : i32
    %73 = tpu.dynamic_rotate %23 by %c434_i32 dim 1 : vector<2x512xf32>, i32 -> vector<2x512xf32>
    %c0_27 = arith.constant 0 : index
    %c1 = arith.constant 1 : index
    %74 = vector.load %arg1[%c0_27, %c1] : memref<2x49xf32, #tpu.memory_space<vmem>>, vector<2x1xf32>
    %75 = vector.extract_strided_slice %73 {offsets = [0, 0], sizes = [2, 256], strides = [1, 1]} : vector<2x512xf32> to vector<2x256xf32>
    %76 = vector.broadcast %74 : vector<2x1xf32> to vector<2x256xf32>
    %77 = arith.mulf %75, %76 : vector<2x256xf32>
    %78 = arith.addf %72, %77 : vector<2x256xf32>
    %c418_i32 = arith.constant 418 : i32
    %79 = tpu.dynamic_rotate %23 by %c418_i32 dim 1 : vector<2x512xf32>, i32 -> vector<2x512xf32>
    %c0_28 = arith.constant 0 : index
    %c8 = arith.constant 8 : index
    %80 = vector.load %arg1[%c0_28, %c8] : memref<2x49xf32, #tpu.memory_space<vmem>>, vector<2x1xf32>
    %81 = vector.extract_strided_slice %79 {offsets = [0, 0], sizes = [2, 256], strides = [1, 1]} : vector<2x512xf32> to vector<2x256xf32>
    %82 = vector.broadcast %80 : vector<2x1xf32> to vector<2x256xf32>
    %83 = arith.mulf %81, %82 : vector<2x256xf32>
    %84 = arith.addf %78, %83 : vector<2x256xf32>
    %c402_i32 = arith.constant 402 : i32
    %85 = tpu.dynamic_rotate %23 by %c402_i32 dim 1 : vector<2x512xf32>, i32 -> vector<2x512xf32>
    %c0_29 = arith.constant 0 : index
    %c15 = arith.constant 15 : index
    %86 = vector.load %arg1[%c0_29, %c15] : memref<2x49xf32, #tpu.memory_space<vmem>>, vector<2x1xf32>
    %87 = vector.extract_strided_slice %85 {offsets = [0, 0], sizes = [2, 256], strides = [1, 1]} : vector<2x512xf32> to vector<2x256xf32>
    %88 = vector.broadcast %86 : vector<2x1xf32> to vector<2x256xf32>
    %89 = arith.mulf %87, %88 : vector<2x256xf32>
    %90 = arith.addf %84, %89 : vector<2x256xf32>
    %c386_i32 = arith.constant 386 : i32
    %91 = tpu.dynamic_rotate %23 by %c386_i32 dim 1 : vector<2x512xf32>, i32 -> vector<2x512xf32>
    %c0_30 = arith.constant 0 : index
    %c22 = arith.constant 22 : index
    %92 = vector.load %arg1[%c0_30, %c22] : memref<2x49xf32, #tpu.memory_space<vmem>>, vector<2x1xf32>
    %93 = vector.extract_strided_slice %91 {offsets = [0, 0], sizes = [2, 256], strides = [1, 1]} : vector<2x512xf32> to vector<2x256xf32>
    %94 = vector.broadcast %92 : vector<2x1xf32> to vector<2x256xf32>
    %95 = arith.mulf %93, %94 : vector<2x256xf32>
    %96 = arith.addf %90, %95 : vector<2x256xf32>
    %c370_i32 = arith.constant 370 : i32
    %97 = tpu.dynamic_rotate %23 by %c370_i32 dim 1 : vector<2x512xf32>, i32 -> vector<2x512xf32>
    %c0_31 = arith.constant 0 : index
    %c29 = arith.constant 29 : index
    %98 = vector.load %arg1[%c0_31, %c29] : memref<2x49xf32, #tpu.memory_space<vmem>>, vector<2x1xf32>
    %99 = vector.extract_strided_slice %97 {offsets = [0, 0], sizes = [2, 256], strides = [1, 1]} : vector<2x512xf32> to vector<2x256xf32>
    %100 = vector.broadcast %98 : vector<2x1xf32> to vector<2x256xf32>
    %101 = arith.mulf %99, %100 : vector<2x256xf32>
    %102 = arith.addf %96, %101 : vector<2x256xf32>
    %c354_i32 = arith.constant 354 : i32
    %103 = tpu.dynamic_rotate %23 by %c354_i32 dim 1 : vector<2x512xf32>, i32 -> vector<2x512xf32>
    %c0_32 = arith.constant 0 : index
    %c36 = arith.constant 36 : index
    %104 = vector.load %arg1[%c0_32, %c36] : memref<2x49xf32, #tpu.memory_space<vmem>>, vector<2x1xf32>
    %105 = vector.extract_strided_slice %103 {offsets = [0, 0], sizes = [2, 256], strides = [1, 1]} : vector<2x512xf32> to vector<2x256xf32>
    %106 = vector.broadcast %104 : vector<2x1xf32> to vector<2x256xf32>
    %107 = arith.mulf %105, %106 : vector<2x256xf32>
    %108 = arith.addf %102, %107 : vector<2x256xf32>
    %c338_i32 = arith.constant 338 : i32
    %109 = tpu.dynamic_rotate %23 by %c338_i32 dim 1 : vector<2x512xf32>, i32 -> vector<2x512xf32>
    %c0_33 = arith.constant 0 : index
    %c43 = arith.constant 43 : index
    %110 = vector.load %arg1[%c0_33, %c43] : memref<2x49xf32, #tpu.memory_space<vmem>>, vector<2x1xf32>
    %111 = vector.extract_strided_slice %109 {offsets = [0, 0], sizes = [2, 256], strides = [1, 1]} : vector<2x512xf32> to vector<2x256xf32>
    %112 = vector.broadcast %110 : vector<2x1xf32> to vector<2x256xf32>
    %113 = arith.mulf %111, %112 : vector<2x256xf32>
    %114 = arith.addf %108, %113 : vector<2x256xf32>
    %c1_34 = arith.constant 1 : index
    %c0_35 = arith.constant 0 : index
    %115 = vector.load %arg2[%c1_34, %c0_35] : memref<7x256xf32, #tpu.memory_space<vmem>>, vector<1x256xf32>
    %116 = vector.broadcast %115 : vector<1x256xf32> to vector<2x256xf32>
    %117 = arith.mulf %114, %116 : vector<2x256xf32>
    %118 = arith.addf %71, %117 : vector<2x256xf32>
    %cst_36 = arith.constant 0.000000e+00 : f32
    %119 = vector.broadcast %cst_36 : f32 to vector<2x256xf32>
    %c433_i32 = arith.constant 433 : i32
    %120 = tpu.dynamic_rotate %23 by %c433_i32 dim 1 : vector<2x512xf32>, i32 -> vector<2x512xf32>
    %c0_37 = arith.constant 0 : index
    %c2 = arith.constant 2 : index
    %121 = vector.load %arg1[%c0_37, %c2] : memref<2x49xf32, #tpu.memory_space<vmem>>, vector<2x1xf32>
    %122 = vector.extract_strided_slice %120 {offsets = [0, 0], sizes = [2, 256], strides = [1, 1]} : vector<2x512xf32> to vector<2x256xf32>
    %123 = vector.broadcast %121 : vector<2x1xf32> to vector<2x256xf32>
    %124 = arith.mulf %122, %123 : vector<2x256xf32>
    %125 = arith.addf %119, %124 : vector<2x256xf32>
    %c417_i32 = arith.constant 417 : i32
    %126 = tpu.dynamic_rotate %23 by %c417_i32 dim 1 : vector<2x512xf32>, i32 -> vector<2x512xf32>
    %c0_38 = arith.constant 0 : index
    %c9 = arith.constant 9 : index
    %127 = vector.load %arg1[%c0_38, %c9] : memref<2x49xf32, #tpu.memory_space<vmem>>, vector<2x1xf32>
    %128 = vector.extract_strided_slice %126 {offsets = [0, 0], sizes = [2, 256], strides = [1, 1]} : vector<2x512xf32> to vector<2x256xf32>
    %129 = vector.broadcast %127 : vector<2x1xf32> to vector<2x256xf32>
    %130 = arith.mulf %128, %129 : vector<2x256xf32>
    %131 = arith.addf %125, %130 : vector<2x256xf32>
    %c401_i32 = arith.constant 401 : i32
    %132 = tpu.dynamic_rotate %23 by %c401_i32 dim 1 : vector<2x512xf32>, i32 -> vector<2x512xf32>
    %c0_39 = arith.constant 0 : index
    %c16 = arith.constant 16 : index
    %133 = vector.load %arg1[%c0_39, %c16] : memref<2x49xf32, #tpu.memory_space<vmem>>, vector<2x1xf32>
    %134 = vector.extract_strided_slice %132 {offsets = [0, 0], sizes = [2, 256], strides = [1, 1]} : vector<2x512xf32> to vector<2x256xf32>
    %135 = vector.broadcast %133 : vector<2x1xf32> to vector<2x256xf32>
    %136 = arith.mulf %134, %135 : vector<2x256xf32>
    %137 = arith.addf %131, %136 : vector<2x256xf32>
    %c385_i32 = arith.constant 385 : i32
    %138 = tpu.dynamic_rotate %23 by %c385_i32 dim 1 : vector<2x512xf32>, i32 -> vector<2x512xf32>
    %c0_40 = arith.constant 0 : index
    %c23 = arith.constant 23 : index
    %139 = vector.load %arg1[%c0_40, %c23] : memref<2x49xf32, #tpu.memory_space<vmem>>, vector<2x1xf32>
    %140 = vector.extract_strided_slice %138 {offsets = [0, 0], sizes = [2, 256], strides = [1, 1]} : vector<2x512xf32> to vector<2x256xf32>
    %141 = vector.broadcast %139 : vector<2x1xf32> to vector<2x256xf32>
    %142 = arith.mulf %140, %141 : vector<2x256xf32>
    %143 = arith.addf %137, %142 : vector<2x256xf32>
    %c369_i32 = arith.constant 369 : i32
    %144 = tpu.dynamic_rotate %23 by %c369_i32 dim 1 : vector<2x512xf32>, i32 -> vector<2x512xf32>
    %c0_41 = arith.constant 0 : index
    %c30 = arith.constant 30 : index
    %145 = vector.load %arg1[%c0_41, %c30] : memref<2x49xf32, #tpu.memory_space<vmem>>, vector<2x1xf32>
    %146 = vector.extract_strided_slice %144 {offsets = [0, 0], sizes = [2, 256], strides = [1, 1]} : vector<2x512xf32> to vector<2x256xf32>
    %147 = vector.broadcast %145 : vector<2x1xf32> to vector<2x256xf32>
    %148 = arith.mulf %146, %147 : vector<2x256xf32>
    %149 = arith.addf %143, %148 : vector<2x256xf32>
    %c353_i32 = arith.constant 353 : i32
    %150 = tpu.dynamic_rotate %23 by %c353_i32 dim 1 : vector<2x512xf32>, i32 -> vector<2x512xf32>
    %c0_42 = arith.constant 0 : index
    %c37 = arith.constant 37 : index
    %151 = vector.load %arg1[%c0_42, %c37] : memref<2x49xf32, #tpu.memory_space<vmem>>, vector<2x1xf32>
    %152 = vector.extract_strided_slice %150 {offsets = [0, 0], sizes = [2, 256], strides = [1, 1]} : vector<2x512xf32> to vector<2x256xf32>
    %153 = vector.broadcast %151 : vector<2x1xf32> to vector<2x256xf32>
    %154 = arith.mulf %152, %153 : vector<2x256xf32>
    %155 = arith.addf %149, %154 : vector<2x256xf32>
    %c337_i32 = arith.constant 337 : i32
    %156 = tpu.dynamic_rotate %23 by %c337_i32 dim 1 : vector<2x512xf32>, i32 -> vector<2x512xf32>
    %c0_43 = arith.constant 0 : index
    %c44 = arith.constant 44 : index
    %157 = vector.load %arg1[%c0_43, %c44] : memref<2x49xf32, #tpu.memory_space<vmem>>, vector<2x1xf32>
    %158 = vector.extract_strided_slice %156 {offsets = [0, 0], sizes = [2, 256], strides = [1, 1]} : vector<2x512xf32> to vector<2x256xf32>
    %159 = vector.broadcast %157 : vector<2x1xf32> to vector<2x256xf32>
    %160 = arith.mulf %158, %159 : vector<2x256xf32>
    %161 = arith.addf %155, %160 : vector<2x256xf32>
    %c2_44 = arith.constant 2 : index
    %c0_45 = arith.constant 0 : index
    %162 = vector.load %arg2[%c2_44, %c0_45] : memref<7x256xf32, #tpu.memory_space<vmem>>, vector<1x256xf32>
    %163 = vector.broadcast %162 : vector<1x256xf32> to vector<2x256xf32>
    %164 = arith.mulf %161, %163 : vector<2x256xf32>
    %165 = arith.addf %118, %164 : vector<2x256xf32>
    %cst_46 = arith.constant 0.000000e+00 : f32
    %166 = vector.broadcast %cst_46 : f32 to vector<2x256xf32>
    %c432_i32 = arith.constant 432 : i32
    %167 = tpu.dynamic_rotate %23 by %c432_i32 dim 1 : vector<2x512xf32>, i32 -> vector<2x512xf32>
    %c0_47 = arith.constant 0 : index
    %c3 = arith.constant 3 : index
    %168 = vector.load %arg1[%c0_47, %c3] : memref<2x49xf32, #tpu.memory_space<vmem>>, vector<2x1xf32>
    %169 = vector.extract_strided_slice %167 {offsets = [0, 0], sizes = [2, 256], strides = [1, 1]} : vector<2x512xf32> to vector<2x256xf32>
    %170 = vector.broadcast %168 : vector<2x1xf32> to vector<2x256xf32>
    %171 = arith.mulf %169, %170 : vector<2x256xf32>
    %172 = arith.addf %166, %171 : vector<2x256xf32>
    %c416_i32 = arith.constant 416 : i32
    %173 = tpu.dynamic_rotate %23 by %c416_i32 dim 1 : vector<2x512xf32>, i32 -> vector<2x512xf32>
    %c0_48 = arith.constant 0 : index
    %c10 = arith.constant 10 : index
    %174 = vector.load %arg1[%c0_48, %c10] : memref<2x49xf32, #tpu.memory_space<vmem>>, vector<2x1xf32>
    %175 = vector.extract_strided_slice %173 {offsets = [0, 0], sizes = [2, 256], strides = [1, 1]} : vector<2x512xf32> to vector<2x256xf32>
    %176 = vector.broadcast %174 : vector<2x1xf32> to vector<2x256xf32>
    %177 = arith.mulf %175, %176 : vector<2x256xf32>
    %178 = arith.addf %172, %177 : vector<2x256xf32>
    %c400_i32 = arith.constant 400 : i32
    %179 = tpu.dynamic_rotate %23 by %c400_i32 dim 1 : vector<2x512xf32>, i32 -> vector<2x512xf32>
    %c0_49 = arith.constant 0 : index
    %c17 = arith.constant 17 : index
    %180 = vector.load %arg1[%c0_49, %c17] : memref<2x49xf32, #tpu.memory_space<vmem>>, vector<2x1xf32>
    %181 = vector.extract_strided_slice %179 {offsets = [0, 0], sizes = [2, 256], strides = [1, 1]} : vector<2x512xf32> to vector<2x256xf32>
    %182 = vector.broadcast %180 : vector<2x1xf32> to vector<2x256xf32>
    %183 = arith.mulf %181, %182 : vector<2x256xf32>
    %184 = arith.addf %178, %183 : vector<2x256xf32>
    %c384_i32 = arith.constant 384 : i32
    %185 = tpu.dynamic_rotate %23 by %c384_i32 dim 1 : vector<2x512xf32>, i32 -> vector<2x512xf32>
    %c0_50 = arith.constant 0 : index
    %c24 = arith.constant 24 : index
    %186 = vector.load %arg1[%c0_50, %c24] : memref<2x49xf32, #tpu.memory_space<vmem>>, vector<2x1xf32>
    %187 = vector.extract_strided_slice %185 {offsets = [0, 0], sizes = [2, 256], strides = [1, 1]} : vector<2x512xf32> to vector<2x256xf32>
    %188 = vector.broadcast %186 : vector<2x1xf32> to vector<2x256xf32>
    %189 = arith.mulf %187, %188 : vector<2x256xf32>
    %190 = arith.addf %184, %189 : vector<2x256xf32>
    %c368_i32 = arith.constant 368 : i32
    %191 = tpu.dynamic_rotate %23 by %c368_i32 dim 1 : vector<2x512xf32>, i32 -> vector<2x512xf32>
    %c0_51 = arith.constant 0 : index
    %c31 = arith.constant 31 : index
    %192 = vector.load %arg1[%c0_51, %c31] : memref<2x49xf32, #tpu.memory_space<vmem>>, vector<2x1xf32>
    %193 = vector.extract_strided_slice %191 {offsets = [0, 0], sizes = [2, 256], strides = [1, 1]} : vector<2x512xf32> to vector<2x256xf32>
    %194 = vector.broadcast %192 : vector<2x1xf32> to vector<2x256xf32>
    %195 = arith.mulf %193, %194 : vector<2x256xf32>
    %196 = arith.addf %190, %195 : vector<2x256xf32>
    %c352_i32 = arith.constant 352 : i32
    %197 = tpu.dynamic_rotate %23 by %c352_i32 dim 1 : vector<2x512xf32>, i32 -> vector<2x512xf32>
    %c0_52 = arith.constant 0 : index
    %c38 = arith.constant 38 : index
    %198 = vector.load %arg1[%c0_52, %c38] : memref<2x49xf32, #tpu.memory_space<vmem>>, vector<2x1xf32>
    %199 = vector.extract_strided_slice %197 {offsets = [0, 0], sizes = [2, 256], strides = [1, 1]} : vector<2x512xf32> to vector<2x256xf32>
    %200 = vector.broadcast %198 : vector<2x1xf32> to vector<2x256xf32>
    %201 = arith.mulf %199, %200 : vector<2x256xf32>
    %202 = arith.addf %196, %201 : vector<2x256xf32>
    %c336_i32 = arith.constant 336 : i32
    %203 = tpu.dynamic_rotate %23 by %c336_i32 dim 1 : vector<2x512xf32>, i32 -> vector<2x512xf32>
    %c0_53 = arith.constant 0 : index
    %c45 = arith.constant 45 : index
    %204 = vector.load %arg1[%c0_53, %c45] : memref<2x49xf32, #tpu.memory_space<vmem>>, vector<2x1xf32>
    %205 = vector.extract_strided_slice %203 {offsets = [0, 0], sizes = [2, 256], strides = [1, 1]} : vector<2x512xf32> to vector<2x256xf32>
    %206 = vector.broadcast %204 : vector<2x1xf32> to vector<2x256xf32>
    %207 = arith.mulf %205, %206 : vector<2x256xf32>
    %208 = arith.addf %202, %207 : vector<2x256xf32>
    %c3_54 = arith.constant 3 : index
    %c0_55 = arith.constant 0 : index
    %209 = vector.load %arg2[%c3_54, %c0_55] : memref<7x256xf32, #tpu.memory_space<vmem>>, vector<1x256xf32>
    %210 = vector.broadcast %209 : vector<1x256xf32> to vector<2x256xf32>
    %211 = arith.mulf %208, %210 : vector<2x256xf32>
    %212 = arith.addf %165, %211 : vector<2x256xf32>
    %cst_56 = arith.constant 0.000000e+00 : f32
    %213 = vector.broadcast %cst_56 : f32 to vector<2x256xf32>
    %c431_i32 = arith.constant 431 : i32
    %214 = tpu.dynamic_rotate %23 by %c431_i32 dim 1 : vector<2x512xf32>, i32 -> vector<2x512xf32>
    %c0_57 = arith.constant 0 : index
    %c4 = arith.constant 4 : index
    %215 = vector.load %arg1[%c0_57, %c4] : memref<2x49xf32, #tpu.memory_space<vmem>>, vector<2x1xf32>
    %216 = vector.extract_strided_slice %214 {offsets = [0, 0], sizes = [2, 256], strides = [1, 1]} : vector<2x512xf32> to vector<2x256xf32>
    %217 = vector.broadcast %215 : vector<2x1xf32> to vector<2x256xf32>
    %218 = arith.mulf %216, %217 : vector<2x256xf32>
    %219 = arith.addf %213, %218 : vector<2x256xf32>
    %c415_i32 = arith.constant 415 : i32
    %220 = tpu.dynamic_rotate %23 by %c415_i32 dim 1 : vector<2x512xf32>, i32 -> vector<2x512xf32>
    %c0_58 = arith.constant 0 : index
    %c11 = arith.constant 11 : index
    %221 = vector.load %arg1[%c0_58, %c11] : memref<2x49xf32, #tpu.memory_space<vmem>>, vector<2x1xf32>
    %222 = vector.extract_strided_slice %220 {offsets = [0, 0], sizes = [2, 256], strides = [1, 1]} : vector<2x512xf32> to vector<2x256xf32>
    %223 = vector.broadcast %221 : vector<2x1xf32> to vector<2x256xf32>
    %224 = arith.mulf %222, %223 : vector<2x256xf32>
    %225 = arith.addf %219, %224 : vector<2x256xf32>
    %c399_i32 = arith.constant 399 : i32
    %226 = tpu.dynamic_rotate %23 by %c399_i32 dim 1 : vector<2x512xf32>, i32 -> vector<2x512xf32>
    %c0_59 = arith.constant 0 : index
    %c18 = arith.constant 18 : index
    %227 = vector.load %arg1[%c0_59, %c18] : memref<2x49xf32, #tpu.memory_space<vmem>>, vector<2x1xf32>
    %228 = vector.extract_strided_slice %226 {offsets = [0, 0], sizes = [2, 256], strides = [1, 1]} : vector<2x512xf32> to vector<2x256xf32>
    %229 = vector.broadcast %227 : vector<2x1xf32> to vector<2x256xf32>
    %230 = arith.mulf %228, %229 : vector<2x256xf32>
    %231 = arith.addf %225, %230 : vector<2x256xf32>
    %c383_i32 = arith.constant 383 : i32
    %232 = tpu.dynamic_rotate %23 by %c383_i32 dim 1 : vector<2x512xf32>, i32 -> vector<2x512xf32>
    %c0_60 = arith.constant 0 : index
    %c25 = arith.constant 25 : index
    %233 = vector.load %arg1[%c0_60, %c25] : memref<2x49xf32, #tpu.memory_space<vmem>>, vector<2x1xf32>
    %234 = vector.extract_strided_slice %232 {offsets = [0, 0], sizes = [2, 256], strides = [1, 1]} : vector<2x512xf32> to vector<2x256xf32>
    %235 = vector.broadcast %233 : vector<2x1xf32> to vector<2x256xf32>
    %236 = arith.mulf %234, %235 : vector<2x256xf32>
    %237 = arith.addf %231, %236 : vector<2x256xf32>
    %c367_i32 = arith.constant 367 : i32
    %238 = tpu.dynamic_rotate %23 by %c367_i32 dim 1 : vector<2x512xf32>, i32 -> vector<2x512xf32>
    %c0_61 = arith.constant 0 : index
    %c32 = arith.constant 32 : index
    %239 = vector.load %arg1[%c0_61, %c32] : memref<2x49xf32, #tpu.memory_space<vmem>>, vector<2x1xf32>
    %240 = vector.extract_strided_slice %238 {offsets = [0, 0], sizes = [2, 256], strides = [1, 1]} : vector<2x512xf32> to vector<2x256xf32>
    %241 = vector.broadcast %239 : vector<2x1xf32> to vector<2x256xf32>
    %242 = arith.mulf %240, %241 : vector<2x256xf32>
    %243 = arith.addf %237, %242 : vector<2x256xf32>
    %c351_i32 = arith.constant 351 : i32
    %244 = tpu.dynamic_rotate %23 by %c351_i32 dim 1 : vector<2x512xf32>, i32 -> vector<2x512xf32>
    %c0_62 = arith.constant 0 : index
    %c39 = arith.constant 39 : index
    %245 = vector.load %arg1[%c0_62, %c39] : memref<2x49xf32, #tpu.memory_space<vmem>>, vector<2x1xf32>
    %246 = vector.extract_strided_slice %244 {offsets = [0, 0], sizes = [2, 256], strides = [1, 1]} : vector<2x512xf32> to vector<2x256xf32>
    %247 = vector.broadcast %245 : vector<2x1xf32> to vector<2x256xf32>
    %248 = arith.mulf %246, %247 : vector<2x256xf32>
    %249 = arith.addf %243, %248 : vector<2x256xf32>
    %c335_i32 = arith.constant 335 : i32
    %250 = tpu.dynamic_rotate %23 by %c335_i32 dim 1 : vector<2x512xf32>, i32 -> vector<2x512xf32>
    %c0_63 = arith.constant 0 : index
    %c46 = arith.constant 46 : index
    %251 = vector.load %arg1[%c0_63, %c46] : memref<2x49xf32, #tpu.memory_space<vmem>>, vector<2x1xf32>
    %252 = vector.extract_strided_slice %250 {offsets = [0, 0], sizes = [2, 256], strides = [1, 1]} : vector<2x512xf32> to vector<2x256xf32>
    %253 = vector.broadcast %251 : vector<2x1xf32> to vector<2x256xf32>
    %254 = arith.mulf %252, %253 : vector<2x256xf32>
    %255 = arith.addf %249, %254 : vector<2x256xf32>
    %c4_64 = arith.constant 4 : index
    %c0_65 = arith.constant 0 : index
    %256 = vector.load %arg2[%c4_64, %c0_65] : memref<7x256xf32, #tpu.memory_space<vmem>>, vector<1x256xf32>
    %257 = vector.broadcast %256 : vector<1x256xf32> to vector<2x256xf32>
    %258 = arith.mulf %255, %257 : vector<2x256xf32>
    %259 = arith.addf %212, %258 : vector<2x256xf32>
    %cst_66 = arith.constant 0.000000e+00 : f32
    %260 = vector.broadcast %cst_66 : f32 to vector<2x256xf32>
    %c430_i32 = arith.constant 430 : i32
    %261 = tpu.dynamic_rotate %23 by %c430_i32 dim 1 : vector<2x512xf32>, i32 -> vector<2x512xf32>
    %c0_67 = arith.constant 0 : index
    %c5 = arith.constant 5 : index
    %262 = vector.load %arg1[%c0_67, %c5] : memref<2x49xf32, #tpu.memory_space<vmem>>, vector<2x1xf32>
    %263 = vector.extract_strided_slice %261 {offsets = [0, 0], sizes = [2, 256], strides = [1, 1]} : vector<2x512xf32> to vector<2x256xf32>
    %264 = vector.broadcast %262 : vector<2x1xf32> to vector<2x256xf32>
    %265 = arith.mulf %263, %264 : vector<2x256xf32>
    %266 = arith.addf %260, %265 : vector<2x256xf32>
    %c414_i32 = arith.constant 414 : i32
    %267 = tpu.dynamic_rotate %23 by %c414_i32 dim 1 : vector<2x512xf32>, i32 -> vector<2x512xf32>
    %c0_68 = arith.constant 0 : index
    %c12 = arith.constant 12 : index
    %268 = vector.load %arg1[%c0_68, %c12] : memref<2x49xf32, #tpu.memory_space<vmem>>, vector<2x1xf32>
    %269 = vector.extract_strided_slice %267 {offsets = [0, 0], sizes = [2, 256], strides = [1, 1]} : vector<2x512xf32> to vector<2x256xf32>
    %270 = vector.broadcast %268 : vector<2x1xf32> to vector<2x256xf32>
    %271 = arith.mulf %269, %270 : vector<2x256xf32>
    %272 = arith.addf %266, %271 : vector<2x256xf32>
    %c398_i32 = arith.constant 398 : i32
    %273 = tpu.dynamic_rotate %23 by %c398_i32 dim 1 : vector<2x512xf32>, i32 -> vector<2x512xf32>
    %c0_69 = arith.constant 0 : index
    %c19 = arith.constant 19 : index
    %274 = vector.load %arg1[%c0_69, %c19] : memref<2x49xf32, #tpu.memory_space<vmem>>, vector<2x1xf32>
    %275 = vector.extract_strided_slice %273 {offsets = [0, 0], sizes = [2, 256], strides = [1, 1]} : vector<2x512xf32> to vector<2x256xf32>
    %276 = vector.broadcast %274 : vector<2x1xf32> to vector<2x256xf32>
    %277 = arith.mulf %275, %276 : vector<2x256xf32>
    %278 = arith.addf %272, %277 : vector<2x256xf32>
    %c382_i32 = arith.constant 382 : i32
    %279 = tpu.dynamic_rotate %23 by %c382_i32 dim 1 : vector<2x512xf32>, i32 -> vector<2x512xf32>
    %c0_70 = arith.constant 0 : index
    %c26 = arith.constant 26 : index
    %280 = vector.load %arg1[%c0_70, %c26] : memref<2x49xf32, #tpu.memory_space<vmem>>, vector<2x1xf32>
    %281 = vector.extract_strided_slice %279 {offsets = [0, 0], sizes = [2, 256], strides = [1, 1]} : vector<2x512xf32> to vector<2x256xf32>
    %282 = vector.broadcast %280 : vector<2x1xf32> to vector<2x256xf32>
    %283 = arith.mulf %281, %282 : vector<2x256xf32>
    %284 = arith.addf %278, %283 : vector<2x256xf32>
    %c366_i32 = arith.constant 366 : i32
    %285 = tpu.dynamic_rotate %23 by %c366_i32 dim 1 : vector<2x512xf32>, i32 -> vector<2x512xf32>
    %c0_71 = arith.constant 0 : index
    %c33 = arith.constant 33 : index
    %286 = vector.load %arg1[%c0_71, %c33] : memref<2x49xf32, #tpu.memory_space<vmem>>, vector<2x1xf32>
    %287 = vector.extract_strided_slice %285 {offsets = [0, 0], sizes = [2, 256], strides = [1, 1]} : vector<2x512xf32> to vector<2x256xf32>
    %288 = vector.broadcast %286 : vector<2x1xf32> to vector<2x256xf32>
    %289 = arith.mulf %287, %288 : vector<2x256xf32>
    %290 = arith.addf %284, %289 : vector<2x256xf32>
    %c350_i32 = arith.constant 350 : i32
    %291 = tpu.dynamic_rotate %23 by %c350_i32 dim 1 : vector<2x512xf32>, i32 -> vector<2x512xf32>
    %c0_72 = arith.constant 0 : index
    %c40 = arith.constant 40 : index
    %292 = vector.load %arg1[%c0_72, %c40] : memref<2x49xf32, #tpu.memory_space<vmem>>, vector<2x1xf32>
    %293 = vector.extract_strided_slice %291 {offsets = [0, 0], sizes = [2, 256], strides = [1, 1]} : vector<2x512xf32> to vector<2x256xf32>
    %294 = vector.broadcast %292 : vector<2x1xf32> to vector<2x256xf32>
    %295 = arith.mulf %293, %294 : vector<2x256xf32>
    %296 = arith.addf %290, %295 : vector<2x256xf32>
    %c334_i32 = arith.constant 334 : i32
    %297 = tpu.dynamic_rotate %23 by %c334_i32 dim 1 : vector<2x512xf32>, i32 -> vector<2x512xf32>
    %c0_73 = arith.constant 0 : index
    %c47 = arith.constant 47 : index
    %298 = vector.load %arg1[%c0_73, %c47] : memref<2x49xf32, #tpu.memory_space<vmem>>, vector<2x1xf32>
    %299 = vector.extract_strided_slice %297 {offsets = [0, 0], sizes = [2, 256], strides = [1, 1]} : vector<2x512xf32> to vector<2x256xf32>
    %300 = vector.broadcast %298 : vector<2x1xf32> to vector<2x256xf32>
    %301 = arith.mulf %299, %300 : vector<2x256xf32>
    %302 = arith.addf %296, %301 : vector<2x256xf32>
    %c5_74 = arith.constant 5 : index
    %c0_75 = arith.constant 0 : index
    %303 = vector.load %arg2[%c5_74, %c0_75] : memref<7x256xf32, #tpu.memory_space<vmem>>, vector<1x256xf32>
    %304 = vector.broadcast %303 : vector<1x256xf32> to vector<2x256xf32>
    %305 = arith.mulf %302, %304 : vector<2x256xf32>
    %306 = arith.addf %259, %305 : vector<2x256xf32>
    %cst_76 = arith.constant 0.000000e+00 : f32
    %307 = vector.broadcast %cst_76 : f32 to vector<2x256xf32>
    %c429_i32 = arith.constant 429 : i32
    %308 = tpu.dynamic_rotate %23 by %c429_i32 dim 1 : vector<2x512xf32>, i32 -> vector<2x512xf32>
    %c0_77 = arith.constant 0 : index
    %c6 = arith.constant 6 : index
    %309 = vector.load %arg1[%c0_77, %c6] : memref<2x49xf32, #tpu.memory_space<vmem>>, vector<2x1xf32>
    %310 = vector.extract_strided_slice %308 {offsets = [0, 0], sizes = [2, 256], strides = [1, 1]} : vector<2x512xf32> to vector<2x256xf32>
    %311 = vector.broadcast %309 : vector<2x1xf32> to vector<2x256xf32>
    %312 = arith.mulf %310, %311 : vector<2x256xf32>
    %313 = arith.addf %307, %312 : vector<2x256xf32>
    %c413_i32 = arith.constant 413 : i32
    %314 = tpu.dynamic_rotate %23 by %c413_i32 dim 1 : vector<2x512xf32>, i32 -> vector<2x512xf32>
    %c0_78 = arith.constant 0 : index
    %c13 = arith.constant 13 : index
    %315 = vector.load %arg1[%c0_78, %c13] : memref<2x49xf32, #tpu.memory_space<vmem>>, vector<2x1xf32>
    %316 = vector.extract_strided_slice %314 {offsets = [0, 0], sizes = [2, 256], strides = [1, 1]} : vector<2x512xf32> to vector<2x256xf32>
    %317 = vector.broadcast %315 : vector<2x1xf32> to vector<2x256xf32>
    %318 = arith.mulf %316, %317 : vector<2x256xf32>
    %319 = arith.addf %313, %318 : vector<2x256xf32>
    %c397_i32 = arith.constant 397 : i32
    %320 = tpu.dynamic_rotate %23 by %c397_i32 dim 1 : vector<2x512xf32>, i32 -> vector<2x512xf32>
    %c0_79 = arith.constant 0 : index
    %c20 = arith.constant 20 : index
    %321 = vector.load %arg1[%c0_79, %c20] : memref<2x49xf32, #tpu.memory_space<vmem>>, vector<2x1xf32>
    %322 = vector.extract_strided_slice %320 {offsets = [0, 0], sizes = [2, 256], strides = [1, 1]} : vector<2x512xf32> to vector<2x256xf32>
    %323 = vector.broadcast %321 : vector<2x1xf32> to vector<2x256xf32>
    %324 = arith.mulf %322, %323 : vector<2x256xf32>
    %325 = arith.addf %319, %324 : vector<2x256xf32>
    %c381_i32 = arith.constant 381 : i32
    %326 = tpu.dynamic_rotate %23 by %c381_i32 dim 1 : vector<2x512xf32>, i32 -> vector<2x512xf32>
    %c0_80 = arith.constant 0 : index
    %c27 = arith.constant 27 : index
    %327 = vector.load %arg1[%c0_80, %c27] : memref<2x49xf32, #tpu.memory_space<vmem>>, vector<2x1xf32>
    %328 = vector.extract_strided_slice %326 {offsets = [0, 0], sizes = [2, 256], strides = [1, 1]} : vector<2x512xf32> to vector<2x256xf32>
    %329 = vector.broadcast %327 : vector<2x1xf32> to vector<2x256xf32>
    %330 = arith.mulf %328, %329 : vector<2x256xf32>
    %331 = arith.addf %325, %330 : vector<2x256xf32>
    %c365_i32 = arith.constant 365 : i32
    %332 = tpu.dynamic_rotate %23 by %c365_i32 dim 1 : vector<2x512xf32>, i32 -> vector<2x512xf32>
    %c0_81 = arith.constant 0 : index
    %c34 = arith.constant 34 : index
    %333 = vector.load %arg1[%c0_81, %c34] : memref<2x49xf32, #tpu.memory_space<vmem>>, vector<2x1xf32>
    %334 = vector.extract_strided_slice %332 {offsets = [0, 0], sizes = [2, 256], strides = [1, 1]} : vector<2x512xf32> to vector<2x256xf32>
    %335 = vector.broadcast %333 : vector<2x1xf32> to vector<2x256xf32>
    %336 = arith.mulf %334, %335 : vector<2x256xf32>
    %337 = arith.addf %331, %336 : vector<2x256xf32>
    %c349_i32 = arith.constant 349 : i32
    %338 = tpu.dynamic_rotate %23 by %c349_i32 dim 1 : vector<2x512xf32>, i32 -> vector<2x512xf32>
    %c0_82 = arith.constant 0 : index
    %c41 = arith.constant 41 : index
    %339 = vector.load %arg1[%c0_82, %c41] : memref<2x49xf32, #tpu.memory_space<vmem>>, vector<2x1xf32>
    %340 = vector.extract_strided_slice %338 {offsets = [0, 0], sizes = [2, 256], strides = [1, 1]} : vector<2x512xf32> to vector<2x256xf32>
    %341 = vector.broadcast %339 : vector<2x1xf32> to vector<2x256xf32>
    %342 = arith.mulf %340, %341 : vector<2x256xf32>
    %343 = arith.addf %337, %342 : vector<2x256xf32>
    %c333_i32 = arith.constant 333 : i32
    %344 = tpu.dynamic_rotate %23 by %c333_i32 dim 1 : vector<2x512xf32>, i32 -> vector<2x512xf32>
    %c0_83 = arith.constant 0 : index
    %c48 = arith.constant 48 : index
    %345 = vector.load %arg1[%c0_83, %c48] : memref<2x49xf32, #tpu.memory_space<vmem>>, vector<2x1xf32>
    %346 = vector.extract_strided_slice %344 {offsets = [0, 0], sizes = [2, 256], strides = [1, 1]} : vector<2x512xf32> to vector<2x256xf32>
    %347 = vector.broadcast %345 : vector<2x1xf32> to vector<2x256xf32>
    %348 = arith.mulf %346, %347 : vector<2x256xf32>
    %349 = arith.addf %343, %348 : vector<2x256xf32>
    %c6_84 = arith.constant 6 : index
    %c0_85 = arith.constant 0 : index
    %350 = vector.load %arg2[%c6_84, %c0_85] : memref<7x256xf32, #tpu.memory_space<vmem>>, vector<1x256xf32>
    %351 = vector.broadcast %350 : vector<1x256xf32> to vector<2x256xf32>
    %352 = arith.mulf %349, %351 : vector<2x256xf32>
    %353 = arith.addf %306, %352 : vector<2x256xf32>
    %354 = vector.extract_strided_slice %353 {offsets = [0, 0], sizes = [1, 256], strides = [1, 1]} : vector<2x256xf32> to vector<1x256xf32>
    %355 = vector.extract_strided_slice %353 {offsets = [1, 0], sizes = [1, 256], strides = [1, 1]} : vector<2x256xf32> to vector<1x256xf32>
    %356 = arith.addf %354, %355 : vector<1x256xf32>
    %357 = arith.negf %356 : vector<1x256xf32>
    %358 = math.exp %357 : vector<1x256xf32>
    %cst_86 = arith.constant 1.000000e+00 : f32
    %359 = vector.broadcast %cst_86 : f32 to vector<1x256xf32>
    %360 = arith.addf %359, %358 : vector<1x256xf32>
    %361 = arith.divf %359, %360 : vector<1x256xf32>
    %c0_87 = arith.constant 0 : index
    %c0_88 = arith.constant 0 : index
    %362 = vector.load %arg6[%c0_87, %c0_88] : memref<1x256xf32, #tpu.memory_space<vmem>>, vector<1x256xf32>
    tpu.vector_store %arg6[%c0_87, %c0_88], %361 {strides = array<i32>} : memref<1x256xf32, #tpu.memory_space<vmem>>, vector<1x256xf32>,
    %c0_i32_89 = arith.constant 0 : i32
    %363 = arith.index_cast %c0_i32_89 : i32 to index
    %c0_90 = arith.constant 0 : index
    %364 = vector.load %arg6[%363, %c0_90] : memref<1x256xf32, #tpu.memory_space<vmem>>, vector<1x256xf32>
    %365 = vector.shape_cast %364 : vector<1x256xf32> to vector<1x256xf32>
    %366 = vector.broadcast %365 : vector<1x256xf32> to vector<4x256xf32>
    %c0_i32_91 = arith.constant 0 : i32
    %c4_i32_92 = arith.constant 4 : i32
    %367 = arith.muli %c0_i32_91, %c4_i32_92 : i32
    %368 = tpu.assume_multiple %367, 4 : i32
    %369 = arith.index_cast %c0_i32_89 : i32 to index
    %370 = arith.index_cast %368 : i32 to index
    %c0_93 = arith.constant 0 : index
    %371 = vector.load %arg3[%369, %370, %c0_93] : memref<1x4x256xf32, #tpu.memory_space<vmem>>, vector<1x4x256xf32>
    %372 = vector.shape_cast %371 : vector<1x4x256xf32> to vector<4x256xf32>
    %373 = arith.mulf %372, %366 : vector<4x256xf32>
    %374 = arith.index_cast %c0_i32_89 : i32 to index
    %375 = arith.index_cast %368 : i32 to index
    %c0_94 = arith.constant 0 : index
    %376 = vector.load %arg4[%374, %375, %c0_94] : memref<1x4x256xf32, #tpu.memory_space<vmem>>, vector<1x4x256xf32>
    %377 = vector.shape_cast %376 : vector<1x4x256xf32> to vector<4x256xf32>
    %378 = vector.shape_cast %373 : vector<4x256xf32> to vector<1x4x256xf32>
    tpu.vector_store %arg4[%374, %375, %c0_94], %378 {strides = array<i32>} : memref<1x4x256xf32, #tpu.memory_space<vmem>>, vector<1x4x256xf32>,
    %c1_i32_95 = arith.constant 1 : i32
    %c1_i32_96 = arith.constant 1 : i32
    return
  }
  func.func @transform_0(%arg0: i32) -> (i32, i32) {
    %c0_i32 = arith.constant 0 : i32
    %c0_i32_0 = arith.constant 0 : i32
    %c0_i32_1 = arith.constant 0 : i32
    return %c0_i32, %c0_i32_0 : i32, i32
  }
  func.func @transform_1(%arg0: i32) -> (i32, i32) {
    %c0_i32 = arith.constant 0 : i32
    %c0_i32_0 = arith.constant 0 : i32
    %c0_i32_1 = arith.constant 0 : i32
    return %c0_i32, %c0_i32_0 : i32, i32
  }
  func.func @transform_2(%arg0: i32) -> (i32, i32, i32) {
    %c0_i32 = arith.constant 0 : i32
    %c0_i32_0 = arith.constant 0 : i32
    %c0_i32_1 = arith.constant 0 : i32
    return %arg0, %c0_i32, %c0_i32_0 : i32, i32, i32
  }
  func.func @transform_3(%arg0: i32) -> (i32, i32, i32) {
    %c0_i32 = arith.constant 0 : i32
    %c0_i32_0 = arith.constant 0 : i32
    %c0_i32_1 = arith.constant 0 : i32
    return %arg0, %c0_i32, %c0_i32_0 : i32, i32, i32
  }
}

</mosaic_0001>

<llo_original>
// kernel: tpu_custom_call.1
$region0: #{tpu_custom_call.1}
  #allocation0 [shape = 'u32[]', space=smem, size = 0x4, offset = 0x4, fixed_abs, tag = 'smem constant byte address 0x4 - core index']
  #allocation1 [shape = 'u32[72,128]{1,0:T(1,128)}', space=vmem, size = 0x9000, scoped, tag = 'internal scratch']
  #allocation2 [shape = 'f32[2,512]{1,0:T(2,128)}', space=vmem, size = 0x1000, scoped, tag = 'scratch operand']
  #allocation3 [shape = 'f32[1,256]{1,0:T(1,128)}', space=vmem, size = 0x400, scoped, tag = 'scratch operand']
  %s0 = inlined_call_operand.hbm [shape: f32[2,49], index: 0, kind: input, shape index: {}]
  %s1 = inlined_call_operand.hbm [shape: f32[7,256], index: 1, kind: input, shape index: {}]
  %s2 = inlined_call_operand.hbm [shape: f32[2,4,256], index: 2, kind: input, shape index: {}]
  %s3 = inlined_call_operand.hbm [shape: f32[2,4,256], index: 3, kind: output, shape index: {}]
  %s4 = sld [smem:[#allocation0]]
  $region57: #{tpu_custom_call.1} parent=0
    _
  %s6 = ssub.s32 1, %s4
  %s7 = scalar_select 0, %s6, %s4
  $region1: #{tpu_custom_call.1} parent=0
    #allocation4 [shape = 'u8[1024]{0}', space=vmem, size = 0x400, scoped, tag = 'input window, operand 0, single buffered']
    #allocation5 [shape = 's32[2]{0}', space=sflag, size = 0x8, scoped, tag = 'scoped memory for tpu_custom_call.1']
    #allocation6 [shape = 's32[2]{0}', space=sflag, size = 0x8, scoped, tag = 'scoped memory for tpu_custom_call.1']
    #allocation7 [shape = 'u8[8192]{0}', space=vmem, size = 0x2000, scoped, tag = 'input window, operand 1, single buffered']
    #allocation8 [shape = 's32[1]{0}', space=sflag, size = 0x4, scoped, tag = 'scoped memory for tpu_custom_call.1']
    #allocation9 [shape = 'u8[8192]{0}', space=vmem, size = 0x2000, scoped, tag = 'input window, operand 2']
    #allocation10 [shape = 'u8[8192]{0}', space=vmem, size = 0x2000, scoped, tag = 'output window, operand 0']
    %8 = vsyncpa [#allocation5], 0
    %9 = vsyncpa [#allocation8], 0
    %10 = vsyncpa [#allocation6], 0
    %s11 = scalar_lea.sflag [#allocation6], 1
    %12 = vsyncpa %s11, 0
    loop: start=0, step=1, limit=4
    $region2: #{tpu_custom_call.1} parent=1 // loop_pre_header
      _
    $region3: #{tpu_custom_call.1} parent=1 // loop_header
      %s14 = sphi 0, %s18
      %p15 = scmp.ge.s32.totalorder %s14, 4
      %s22 = sphi 0, %s22
      %s24 = sphi 0, %s22
      %s25 = sphi 0, %s24
      %s39 = sphi 0, %s25
      %s43 = sphi 0, %s43
      %s45 = sphi 0, %s43
      %s46 = sphi 0, %s45
      %s60 = sphi 0, %s46
      %s66 = sphi 0, %s68
      %s69 = sphi 0, %s66
      %s70 = sphi 0, %s69
      %s86 = sphi 0, %s70
      %s92 = sphi 0, %s94
      %s95 = sphi 0, %s92
      %s96 = sphi 0, %s95
      %s112 = sphi 0, %s96
    $region4: #{tpu_custom_call.1} parent=1 // loop_header_branch
      %17 = sbr.rel (%p15) target = $region8
    $region5: #{tpu_custom_call.1} parent=1 // loop_body
      %s19 = ssub.s32 %s14, 1
      %s20 = ssub.s32 %s14, 2
      %s21 = sadd.s32 %s14, 1
      %s23 = sadd.s32 %s22, 1
      %p26 = scmp.eq.s32.totalorder %s14, 1
      %p27 = scmp.ne.s32.totalorder %s22, %s24
      %p28 = scmp.eq.s32.totalorder %s14, 0
      %p29 = por %p27, %p28
      %p30 = scmp.ne.s32.totalorder %s22, %s24
      %p31 = scmp.eq.s32.totalorder %s19, 1
      %p32 = por %p30, %p31
      %p33 = scmp.ne.s32.totalorder %s24, %s25
      %p34 = scmp.eq.s32.totalorder %s19, 0
      %p35 = por %p33, %p34
      %p36 = scmp.ne.s32.totalorder %s24, %s25
      %p37 = scmp.eq.s32.totalorder %s20, 1
      %p38 = por %p36, %p37
      %p40 = scmp.ne.s32.totalorder %s25, %s39
      %p41 = scmp.eq.s32.totalorder %s20, 0
      %p42 = por %p40, %p41
      %s44 = sadd.s32 %s43, 1
      %p47 = scmp.eq.s32.totalorder %s14, 1
      %p48 = scmp.ne.s32.totalorder %s43, %s45
      %p49 = scmp.eq.s32.totalorder %s14, 0
      %p50 = por %p48, %p49
      %p51 = scmp.ne.s32.totalorder %s43, %s45
      %p52 = scmp.eq.s32.totalorder %s19, 1
      %p53 = por %p51, %p52
      %p54 = scmp.ne.s32.totalorder %s45, %s46
      %p55 = scmp.eq.s32.totalorder %s19, 0
      %p56 = por %p54, %p55
      %p57 = scmp.ne.s32.totalorder %s45, %s46
      %p58 = scmp.eq.s32.totalorder %s20, 1
      %p59 = por %p57, %p58
      %p61 = scmp.ne.s32.totalorder %s46, %s60
      %p62 = scmp.eq.s32.totalorder %s20, 0
      %p63 = por %p61, %p62
      %s64 = ssub.s32 %s14, %s21
      %p65 = scmp.eq.s32.totalorder %s64, 0
      %s67 = sadd.s32 %s66, 1
      %s68 = scalar_select %p65, %s66, %s67
      %p71 = pneg %p65
      %p72 = scmp.eq.s32.totalorder %s14, 1
      %p73 = por %p71, %p72
      %p74 = scmp.ne.s32.totalorder %s66, %s69
      %p75 = scmp.eq.s32.totalorder %s14, 0
      %p76 = por %p74, %p75
      %p77 = scmp.ne.s32.totalorder %s66, %s69
      %p78 = scmp.eq.s32.totalorder %s19, 1
      %p79 = por %p77, %p78
      %p80 = scmp.ne.s32.totalorder %s69, %s70
      %p81 = scmp.eq.s32.totalorder %s19, 0
      %p82 = por %p80, %p81
      %p83 = scmp.ne.s32.totalorder %s69, %s70
      %p84 = scmp.eq.s32.totalorder %s20, 1
      %p85 = por %p83, %p84
      %p87 = scmp.ne.s32.totalorder %s70, %s86
      %p88 = scmp.eq.s32.totalorder %s20, 0
      %p89 = por %p87, %p88
      %s90 = ssub.s32 %s14, %s21
      %p91 = scmp.eq.s32.totalorder %s90, 0
      %s93 = sadd.s32 %s92, 1
      %s94 = scalar_select %p91, %s92, %s93
      %p97 = pneg %p91
      %p98 = scmp.eq.s32.totalorder %s14, 1
      %p99 = por %p97, %p98
      %p100 = scmp.ne.s32.totalorder %s92, %s95
      %p101 = scmp.eq.s32.totalorder %s14, 0
      %p102 = por %p100, %p101
      %p103 = scmp.ne.s32.totalorder %s92, %s95
      %p104 = scmp.eq.s32.totalorder %s19, 1
      %p105 = por %p103, %p104
      %p106 = scmp.ne.s32.totalorder %s95, %s96
      %p107 = scmp.eq.s32.totalorder %s19, 0
      %p108 = por %p106, %p107
      %p109 = scmp.ne.s32.totalorder %s95, %s96
      %p110 = scmp.eq.s32.totalorder %s20, 1
      %p111 = por %p109, %p110
      %p113 = scmp.ne.s32.totalorder %s96, %s112
      %p114 = scmp.eq.s32.totalorder %s20, 0
      %p115 = por %p113, %p114
      %p116 = scmp.le.s32.totalorder 1, %s14
      %p117 = scmp.lt.s32.totalorder %s14, 3
      %p118 = pnand %p116, %p117
      %p119 = pneg %p118
      // Predicated region
      $region9: #{tpu_custom_call.1} parent=5 // pred_check
        _
      $region10: #{tpu_custom_call.1} parent=5 // pred_check_branch
        %121 = sbr.rel (%p118) target = $region12
      $region11: #{tpu_custom_call.1} parent=5 // pred_region
        %s122 = ssub.s32 %s14, 1
        // Predicated region
        $region13: #{tpu_custom_call.1} parent=11 // pred_check
          %p123 = pneg %p35
        $region14: #{tpu_custom_call.1} parent=11 // pred_check_branch
          %125 = sbr.rel (%p123) target = $region16
        $region15: #{tpu_custom_call.1} parent=11 // pred_region
          %127 = vsyncadd [#allocation5], 0
          %s129 = sshll.u32 %s0, 4
          %s130 = int_to_ptr.hbm [resolvable:$true] %s129
          %s131 = sshll.u32 [#allocation4], 4
          %s132 = int_to_ptr.vmem [resolvable:$true] %s131
          %134 = dma.hbm_to_vmem [thread:$0]  %s130, 32, %s132, [#allocation5]
        $region16: #{tpu_custom_call.1} parent=11 // pred_fallthru
          _
        // Predicated region
        $region17: #{tpu_custom_call.1} parent=11 // pred_check
          %p135 = pneg %p56
        $region18: #{tpu_custom_call.1} parent=11 // pred_check_branch
          %137 = sbr.rel (%p135) target = $region20
        $region19: #{tpu_custom_call.1} parent=11 // pred_region
          %139 = vsyncadd [#allocation8], 0
          %s141 = sshll.u32 %s1, 4
          %s142 = int_to_ptr.hbm [resolvable:$true] %s141
          %s143 = sshll.u32 [#allocation7], 4
          %s144 = int_to_ptr.vmem [resolvable:$true] %s143
          %146 = dma.hbm_to_vmem [thread:$0]  %s142, 256, %s144, [#allocation8]
        $region20: #{tpu_custom_call.1} parent=11 // pred_fallthru
          _
      $region12: #{tpu_custom_call.1} parent=5 // pred_fallthru
        _
      %p147 = scmp.lt.s32.totalorder %s14, 2
      // Predicated region
      $region21: #{tpu_custom_call.1} parent=5 // pred_check
        %p148 = pneg %p147
      $region22: #{tpu_custom_call.1} parent=5 // pred_check_branch
        %150 = sbr.rel (%p148) target = $region24
      $region23: #{tpu_custom_call.1} parent=5 // pred_region
        // Predicated region
        $region25: #{tpu_custom_call.1} parent=23 // pred_check
          %p151 = pneg %p76
        $region26: #{tpu_custom_call.1} parent=23 // pred_check_branch
          %153 = sbr.rel (%p151) target = $region28
        $region27: #{tpu_custom_call.1} parent=23 // pred_region
          %s154 = sand.u32 %s14, 1
          %s155 = scalar_lea.sflag [#allocation5], %s154
          %s156 = sand.u32 %s66, 1
          %s157 = smul.addr %s156, 8
          %s158 = scalar_lea.vmem [#allocation9], %s157
          %160 = vsyncadd %s155, 0
          %s161 = smul.addr %s14, 2
          %s162 = smul.addr %s161, 4
          %s163 = scalar_lea.hbm %s2, %s162
          %s165 = sshll.u32 %s163, 4
          %s166 = int_to_ptr.hbm [resolvable:$true] %s165
          %s167 = sshll.u32 %s158, 4
          %s168 = int_to_ptr.vmem [resolvable:$true] %s167
          %170 = dma.hbm_to_vmem [thread:$0]  %s166, 128, %s168, %s155
        $region28: #{tpu_custom_call.1} parent=23 // pred_fallthru
          _
      $region24: #{tpu_custom_call.1} parent=5 // pred_fallthru
        _
      %p171 = scmp.le.s32.totalorder 1, %s14
      %p172 = scmp.lt.s32.totalorder %s14, 3
      %p173 = pnand %p171, %p172
      %p174 = pneg %p173
      // Predicated region
      $region29: #{tpu_custom_call.1} parent=5 // pred_check
        _
      $region30: #{tpu_custom_call.1} parent=5 // pred_check_branch
        %176 = sbr.rel (%p173) target = $region32
      $region31: #{tpu_custom_call.1} parent=5 // pred_region
        %s177 = ssub.s32 %s14, 1
        // Predicated region
        $region33: #{tpu_custom_call.1} parent=31 // pred_check
          %p178 = pneg %p35
        $region34: #{tpu_custom_call.1} parent=31 // pred_check_branch
          %180 = sbr.rel (%p178) target = $region36
        $region35: #{tpu_custom_call.1} parent=31 // pred_region
          %182 = dma.done [#allocation5], 32
        $region36: #{tpu_custom_call.1} parent=31 // pred_fallthru
          _
        // Predicated region
        $region37: #{tpu_custom_call.1} parent=31 // pred_check
          %p183 = pneg %p56
        $region38: #{tpu_custom_call.1} parent=31 // pred_check_branch
          %185 = sbr.rel (%p183) target = $region40
        $region39: #{tpu_custom_call.1} parent=31 // pred_region
          %187 = dma.done [#allocation8], 256
        $region40: #{tpu_custom_call.1} parent=31 // pred_fallthru
          _
        %s188 = sand.u32 %s19, 1
        %s189 = scalar_lea.sflag [#allocation5], %s188
        %s190 = sand.u32 %s69, 1
        %s191 = smul.addr %s190, 8
        %s192 = scalar_lea.vmem [#allocation9], %s191
        // Predicated region
        $region41: #{tpu_custom_call.1} parent=31 // pred_check
          %p193 = pneg %p82
        $region42: #{tpu_custom_call.1} parent=31 // pred_check_branch
          %195 = sbr.rel (%p193) target = $region44
        $region43: #{tpu_custom_call.1} parent=31 // pred_region
          %197 = dma.done %s189, 128
        $region44: #{tpu_custom_call.1} parent=31 // pred_fallthru
          _
        %p198 = pneg %p35
        %p199 = pneg %p32
        %p200 = pneg %p56
        %p201 = pneg %p53
        %s202 = sand.u32 %s19, 1
        %s203 = scalar_lea.sflag [#allocation5], %s202
        %s204 = sand.u32 %s69, 1
        %s205 = smul.addr %s204, 8
        %s206 = scalar_lea.vmem [#allocation9], %s205
        %p207 = pneg %p82
        %p208 = pneg %p79
        %p209 = pneg %p108
        %p210 = pneg %p105
        %s211 = sand.u32 %s95, 1
        %s212 = scalar_lea.sflag [#allocation6], %s211
        %s213 = sand.u32 %s95, 1
        %s214 = smul.addr %s213, 8
        %s215 = scalar_lea.vmem [#allocation10], %s214
        %216 = vst [vmem:[#allocation2] sm:$0x3] 0.0
        %217 = vst [vmem:[#allocation2 + $0x6] sm:$0x3] 0.0
        %s218 = smul.u32 0, 2
        %s219 = smul.addr %s218, 4
        %s220 = scalar_lea.vmem %s192, %s219 [#allocation9]
        %v221 = vld [vmem:[%s220] sm:$0xff]
        %v222 = vadd.f32 %v221, 0.0
        %224 = vst [vmem:[#allocation1] ss:$2 sm:$0xff] %v222
        %v225 = vld.sshfl [vmem:[#allocation1] sm:$0xff pattern:$0x75316420]
        %v226 = vld.sshfl [vmem:[#allocation1 + $0x8] sm:$0xff pattern:$0x75316420]
        %vm229 = vcmask 1043456
        %v230 = vsel %vm229, %v225, 0.0
        %v231 = vrot.slane %v230, 4
        %v232 = vadd.f32 %v230, %v231
        %v233 = vrot.slane %v232, 2
        %v234 = vadd.f32 %v232, %v233
        %v235 = vrot.slane %v234, 1
        %v236 = vadd.f32 %v234, %v235
        %v237 = vsel %vm229, %v226, 0.0
        %v238 = vrot.slane %v237, 4
        %v239 = vadd.f32 %v237, %v238
        %v240 = vrot.slane %v239, 2
        %v241 = vadd.f32 %v239, %v240
        %v242 = vrot.slane %v241, 1
        %v243 = vadd.f32 %v241, %v242
        %v246 = vrot.slane %v243, 7
        %vm247 = vcmask 1040384
        %v248 = vsel %vm247, %v236, %v246
        %v250 = vlaneseq
        %vm251 = vcmp.ge.s32.totalorder %v250, 0
        %vm252 = vcmp.lt.s32.totalorder %v250, 256
        %vm253 = vmand %vm251, %vm252
        %s254 = scalar_lea.vmem [#allocation2], 2
        %255 = vst.msk [vmem:[%s254] ss:$2 sm:$0x3] %vm253, %v248
        %257 = vst [vmem:[#allocation1] ss:$2 sm:$0xff] %v221
        %v258 = vld.sshfl [vmem:[#allocation1] sm:$0xff pattern:$0x75316420]
        %v259 = vld.sshfl [vmem:[#allocation1 + $0x8] sm:$0xff pattern:$0x75316420]
        %v262 = vsel %vm229, %v258, -inf
        %v263 = vrot.slane %v262, 4
        %v264 = vmax.f32 %v262, %v263
        %v265 = vrot.slane %v264, 2
        %v266 = vmax.f32 %v264, %v265
        %v267 = vrot.slane %v266, 1
        %v268 = vmax.f32 %v266, %v267
        %v269 = vsel %vm229, %v259, -inf
        %v270 = vrot.slane %v269, 4
        %v271 = vmax.f32 %v269, %v270
        %v272 = vrot.slane %v271, 2
        %v273 = vmax.f32 %v271, %v272
        %v274 = vrot.slane %v273, 1
        %v275 = vmax.f32 %v273, %v274
        %v278 = vrot.slane %v275, 7
        %v279 = vsel %vm247, %v268, %v278
        %s281 = scalar_lea.vmem [#allocation2], 3
        %282 = vst.msk [vmem:[%s281] ss:$2 sm:$0x3] %vm253, %v279
        %v283 = vld [vmem:[#allocation2] sm:$0xff]
        %285 = vst [vmem:[#allocation1] ss:$4 sm:$0xff] %v283
        %v286 = vld.sshfl [vmem:[#allocation1] sm:$0xff pattern:$0x73625140]
        %v287 = vld.sshfl [vmem:[#allocation1 + $0x8] sm:$0xff pattern:$0x73625140]
        %v288 = vld.sshfl [vmem:[#allocation1 + $0x10] sm:$0xff pattern:$0x73625140]
        %292 = vrot.lane.b32.xlu0 %v286, 51
        %v293 = vpop.permute.xlu0 %292
        %294 = vrot.lane.b32.xlu0 %v287, 51
        %v295 = vpop.permute.xlu0 %294
        %296 = vrot.lane.b32.xlu0 %v288, 51
        %v297 = vpop.permute.xlu0 %296
        %v298 = vlaneseq
        %v299 = vand.u32 %v298, 127
        %vm300 = vcmp.lt.s32.totalorder %v299, 51
        %v301 = vsel %vm300, %v295, %v297
        %v302 = vsel %vm300, %v293, %v295
        %v303 = vld [vmem:[#allocation4] sm:$0x3]
        %305 = vset.pattern.permute.xlu0 0
        %306 = vperm.xlu0 %305, %v303
        %v307 = vpop.permute.xlu0 %306
        %v309 = vmul.f32 %v302, %v307
        %v310 = vmul.f32 %v301, %v307
        %v311 = vadd.f32 %v309, 0.0
        %v312 = vadd.f32 %v310, 0.0
        %313 = vst [vmem:[#allocation1] ss:$4 sm:$0xff] %v283
        %v314 = vld.sshfl [vmem:[#allocation1] sm:$0xff pattern:$0x73625140]
        %v315 = vld.sshfl [vmem:[#allocation1 + $0x8] sm:$0xff pattern:$0x73625140]
        %v316 = vld.sshfl [vmem:[#allocation1 + $0x10] sm:$0xff pattern:$0x73625140]
        %320 = vrot.lane.b32.xlu0 %v314, 35
        %v321 = vpop.permute.xlu0 %320
        %322 = vrot.lane.b32.xlu0 %v315, 35
        %v323 = vpop.permute.xlu0 %322
        %324 = vrot.lane.b32.xlu0 %v316, 35
        %v325 = vpop.permute.xlu0 %324
        %vm326 = vcmp.lt.s32.totalorder %v299, 35
        %v327 = vsel %vm326, %v323, %v325
        %v328 = vsel %vm326, %v321, %v323
        %v329 = vld [vmem:[#allocation4] sm:$0x3]
        %331 = vset.pattern.permute.xlu0 7
        %332 = vperm.xlu0 %331, %v329
        %v333 = vpop.permute.xlu0 %332
        %v335 = vmul.f32 %v328, %v333
        %v336 = vmul.f32 %v327, %v333
        %v337 = vadd.f32 %v311, %v335
        %v338 = vadd.f32 %v312, %v336
        %339 = vst [vmem:[#allocation1] ss:$4 sm:$0xff] %v283
        %v340 = vld.sshfl [vmem:[#allocation1] sm:$0xff pattern:$0x73625140]
        %v341 = vld.sshfl [vmem:[#allocation1 + $0x8] sm:$0xff pattern:$0x73625140]
        %v342 = vld.sshfl [vmem:[#allocation1 + $0x10] sm:$0xff pattern:$0x73625140]
        %346 = vrot.lane.b32.xlu0 %v340, 19
        %v347 = vpop.permute.xlu0 %346
        %348 = vrot.lane.b32.xlu0 %v341, 19
        %v349 = vpop.permute.xlu0 %348
        %350 = vrot.lane.b32.xlu0 %v342, 19
        %v351 = vpop.permute.xlu0 %350
        %vm352 = vcmp.lt.s32.totalorder %v299, 19
        %v353 = vsel %vm352, %v349, %v351
        %v354 = vsel %vm352, %v347, %v349
        %v355 = vld [vmem:[#allocation4] sm:$0x3]
        %357 = vset.pattern.permute.xlu0 14
        %358 = vperm.xlu0 %357, %v355
        %v359 = vpop.permute.xlu0 %358
        %v361 = vmul.f32 %v354, %v359
        %v362 = vmul.f32 %v353, %v359
        %v363 = vadd.f32 %v337, %v361
        %v364 = vadd.f32 %v338, %v362
        %365 = vst [vmem:[#allocation1] ss:$4 sm:$0xff] %v283
        %v366 = vld.sshfl [vmem:[#allocation1] sm:$0xff pattern:$0x73625140]
        %v367 = vld.sshfl [vmem:[#allocation1 + $0x8] sm:$0xff pattern:$0x73625140]
        %v368 = vld.sshfl [vmem:[#allocation1 + $0x10] sm:$0xff pattern:$0x73625140]
        %372 = vrot.lane.b32.xlu0 %v366, 3
        %v373 = vpop.permute.xlu0 %372
        %374 = vrot.lane.b32.xlu0 %v367, 3
        %v375 = vpop.permute.xlu0 %374
        %376 = vrot.lane.b32.xlu0 %v368, 3
        %v377 = vpop.permute.xlu0 %376
        %vm378 = vcmp.lt.s32.totalorder %v299, 3
        %v379 = vsel %vm378, %v375, %v377
        %v380 = vsel %vm378, %v373, %v375
        %v381 = vld [vmem:[#allocation4] sm:$0x3]
        %383 = vset.pattern.permute.xlu0 21
        %384 = vperm.xlu0 %383, %v381
        %v385 = vpop.permute.xlu0 %384
        %v387 = vmul.f32 %v380, %v385
        %v388 = vmul.f32 %v379, %v385
        %v389 = vadd.f32 %v363, %v387
        %v390 = vadd.f32 %v364, %v388
        %391 = vst [vmem:[#allocation1] ss:$4 sm:$0xff] %v283
        %v392 = vld.sshfl [vmem:[#allocation1 + $0x8] sm:$0xff pattern:$0x73625140]
        %v393 = vld.sshfl [vmem:[#allocation1 + $0x10] sm:$0xff pattern:$0x73625140]
        %v394 = vld.sshfl [vmem:[#allocation1 + $0x18] sm:$0xff pattern:$0x73625140]
        %398 = vrot.lane.b32.xlu0 %v392, 115
        %v399 = vpop.permute.xlu0 %398
        %400 = vrot.lane.b32.xlu0 %v393, 115
        %v401 = vpop.permute.xlu0 %400
        %402 = vrot.lane.b32.xlu0 %v394, 115
        %v403 = vpop.permute.xlu0 %402
        %vm404 = vcmp.lt.s32.totalorder %v299, 115
        %v405 = vsel %vm404, %v401, %v403
        %v406 = vsel %vm404, %v399, %v401
        %v407 = vld [vmem:[#allocation4] sm:$0x3]
        %409 = vset.pattern.permute.xlu0 28
        %410 = vperm.xlu0 %409, %v407
        %v411 = vpop.permute.xlu0 %410
        %v413 = vmul.f32 %v406, %v411
        %v414 = vmul.f32 %v405, %v411
        %v415 = vadd.f32 %v389, %v413
        %v416 = vadd.f32 %v390, %v414
        %417 = vst [vmem:[#allocation1] ss:$4 sm:$0xff] %v283
        %v418 = vld.sshfl [vmem:[#allocation1 + $0x8] sm:$0xff pattern:$0x73625140]
        %v419 = vld.sshfl [vmem:[#allocation1 + $0x10] sm:$0xff pattern:$0x73625140]
        %v420 = vld.sshfl [vmem:[#allocation1 + $0x18] sm:$0xff pattern:$0x73625140]
        %424 = vrot.lane.b32.xlu0 %v418, 99
        %v425 = vpop.permute.xlu0 %424
        %426 = vrot.lane.b32.xlu0 %v419, 99
        %v427 = vpop.permute.xlu0 %426
        %428 = vrot.lane.b32.xlu0 %v420, 99
        %v429 = vpop.permute.xlu0 %428
        %vm430 = vcmp.lt.s32.totalorder %v299, 99
        %v431 = vsel %vm430, %v427, %v429
        %v432 = vsel %vm430, %v425, %v427
        %v433 = vld [vmem:[#allocation4] sm:$0x3]
        %435 = vset.pattern.permute.xlu0 35
        %436 = vperm.xlu0 %435, %v433
        %v437 = vpop.permute.xlu0 %436
        %v439 = vmul.f32 %v432, %v437
        %v440 = vmul.f32 %v431, %v437
        %v441 = vadd.f32 %v415, %v439
        %v442 = vadd.f32 %v416, %v440
        %443 = vst [vmem:[#allocation1] ss:$4 sm:$0xff] %v283
        %v444 = vld.sshfl [vmem:[#allocation1 + $0x8] sm:$0xff pattern:$0x73625140]
        %v445 = vld.sshfl [vmem:[#allocation1 + $0x10] sm:$0xff pattern:$0x73625140]
        %v446 = vld.sshfl [vmem:[#allocation1 + $0x18] sm:$0xff pattern:$0x73625140]
        %450 = vrot.lane.b32.xlu0 %v444, 83
        %v451 = vpop.permute.xlu0 %450
        %452 = vrot.lane.b32.xlu0 %v445, 83
        %v453 = vpop.permute.xlu0 %452
        %454 = vrot.lane.b32.xlu0 %v446, 83
        %v455 = vpop.permute.xlu0 %454
        %vm456 = vcmp.lt.s32.totalorder %v299, 83
        %v457 = vsel %vm456, %v453, %v455
        %v458 = vsel %vm456, %v451, %v453
        %v459 = vld [vmem:[#allocation4] sm:$0x3]
        %461 = vset.pattern.permute.xlu0 42
        %462 = vperm.xlu0 %461, %v459
        %v463 = vpop.permute.xlu0 %462
        %v465 = vmul.f32 %v458, %v463
        %v466 = vmul.f32 %v457, %v463
        %v467 = vadd.f32 %v441, %v465
        %v468 = vadd.f32 %v442, %v466
        %v469 = vld [vmem:[#allocation7] ss:$8 sm:$0x3]
        %v471 = vperm.slane %v469, 0
        %v472 = vperm.slane %v469, 1
        %v475 = vmul.f32 %v467, %v471
        %v476 = vmul.f32 %v468, %v472
        %v477 = vadd.f32 %v475, 0.0
        %v478 = vadd.f32 %v476, 0.0
        %479 = vst [vmem:[#allocation1] ss:$4 sm:$0xff] %v283
        %v480 = vld.sshfl [vmem:[#allocation1] sm:$0xff pattern:$0x73625140]
        %v481 = vld.sshfl [vmem:[#allocation1 + $0x8] sm:$0xff pattern:$0x73625140]
        %v482 = vld.sshfl [vmem:[#allocation1 + $0x10] sm:$0xff pattern:$0x73625140]
        %486 = vrot.lane.b32.xlu0 %v480, 50
        %v487 = vpop.permute.xlu0 %486
        %488 = vrot.lane.b32.xlu0 %v481, 50
        %v489 = vpop.permute.xlu0 %488
        %490 = vrot.lane.b32.xlu0 %v482, 50
        %v491 = vpop.permute.xlu0 %490
        %vm492 = vcmp.lt.s32.totalorder %v299, 50
        %v493 = vsel %vm492, %v489, %v491
        %v494 = vsel %vm492, %v487, %v489
        %v495 = vld [vmem:[#allocation4] sm:$0x3]
        %497 = vset.pattern.permute.xlu0 1
        %498 = vperm.xlu0 %497, %v495
        %v499 = vpop.permute.xlu0 %498
        %v501 = vmul.f32 %v494, %v499
        %v502 = vmul.f32 %v493, %v499
        %v503 = vadd.f32 %v501, 0.0
        %v504 = vadd.f32 %v502, 0.0
        %505 = vst [vmem:[#allocation1] ss:$4 sm:$0xff] %v283
        %v506 = vld.sshfl [vmem:[#allocation1] sm:$0xff pattern:$0x73625140]
        %v507 = vld.sshfl [vmem:[#allocation1 + $0x8] sm:$0xff pattern:$0x73625140]
        %v508 = vld.sshfl [vmem:[#allocation1 + $0x10] sm:$0xff pattern:$0x73625140]
        %512 = vrot.lane.b32.xlu0 %v506, 34
        %v513 = vpop.permute.xlu0 %512
        %514 = vrot.lane.b32.xlu0 %v507, 34
        %v515 = vpop.permute.xlu0 %514
        %516 = vrot.lane.b32.xlu0 %v508, 34
        %v517 = vpop.permute.xlu0 %516
        %vm518 = vcmp.lt.s32.totalorder %v299, 34
        %v519 = vsel %vm518, %v515, %v517
        %v520 = vsel %vm518, %v513, %v515
        %v521 = vld [vmem:[#allocation4] sm:$0x3]
        %523 = vset.pattern.permute.xlu0 8
        %524 = vperm.xlu0 %523, %v521
        %v525 = vpop.permute.xlu0 %524
        %v527 = vmul.f32 %v520, %v525
        %v528 = vmul.f32 %v519, %v525
        %v529 = vadd.f32 %v503, %v527
        %v530 = vadd.f32 %v504, %v528
        %531 = vst [vmem:[#allocation1] ss:$4 sm:$0xff] %v283
        %v532 = vld.sshfl [vmem:[#allocation1] sm:$0xff pattern:$0x73625140]
        %v533 = vld.sshfl [vmem:[#allocation1 + $0x8] sm:$0xff pattern:$0x73625140]
        %v534 = vld.sshfl [vmem:[#allocation1 + $0x10] sm:$0xff pattern:$0x73625140]
        %538 = vrot.lane.b32.xlu0 %v532, 18
        %v539 = vpop.permute.xlu0 %538
        %540 = vrot.lane.b32.xlu0 %v533, 18
        %v541 = vpop.permute.xlu0 %540
        %542 = vrot.lane.b32.xlu0 %v534, 18
        %v543 = vpop.permute.xlu0 %542
        %vm544 = vcmp.lt.s32.totalorder %v299, 18
        %v545 = vsel %vm544, %v541, %v543
        %v546 = vsel %vm544, %v539, %v541
        %v547 = vld [vmem:[#allocation4] sm:$0x3]
        %549 = vset.pattern.permute.xlu0 15
        %550 = vperm.xlu0 %549, %v547
        %v551 = vpop.permute.xlu0 %550
        %v553 = vmul.f32 %v546, %v551
        %v554 = vmul.f32 %v545, %v551
        %v555 = vadd.f32 %v529, %v553
        %v556 = vadd.f32 %v530, %v554
        %557 = vst [vmem:[#allocation1] ss:$4 sm:$0xff] %v283
        %v558 = vld.sshfl [vmem:[#allocation1] sm:$0xff pattern:$0x73625140]
        %v559 = vld.sshfl [vmem:[#allocation1 + $0x8] sm:$0xff pattern:$0x73625140]
        %v560 = vld.sshfl [vmem:[#allocation1 + $0x10] sm:$0xff pattern:$0x73625140]
        %564 = vrot.lane.b32.xlu0 %v558, 2
        %v565 = vpop.permute.xlu0 %564
        %566 = vrot.lane.b32.xlu0 %v559, 2
        %v567 = vpop.permute.xlu0 %566
        %568 = vrot.lane.b32.xlu0 %v560, 2
        %v569 = vpop.permute.xlu0 %568
        %vm570 = vcmp.lt.s32.totalorder %v299, 2
        %v571 = vsel %vm570, %v567, %v569
        %v572 = vsel %vm570, %v565, %v567
        %v573 = vld [vmem:[#allocation4] sm:$0x3]
        %575 = vset.pattern.permute.xlu0 22
        %576 = vperm.xlu0 %575, %v573
        %v577 = vpop.permute.xlu0 %576
        %v579 = vmul.f32 %v572, %v577
        %v580 = vmul.f32 %v571, %v577
        %v581 = vadd.f32 %v555, %v579
        %v582 = vadd.f32 %v556, %v580
        %583 = vst [vmem:[#allocation1] ss:$4 sm:$0xff] %v283
        %v584 = vld.sshfl [vmem:[#allocation1 + $0x8] sm:$0xff pattern:$0x73625140]
        %v585 = vld.sshfl [vmem:[#allocation1 + $0x10] sm:$0xff pattern:$0x73625140]
        %v586 = vld.sshfl [vmem:[#allocation1 + $0x18] sm:$0xff pattern:$0x73625140]
        %590 = vrot.lane.b32.xlu0 %v584, 114
        %v591 = vpop.permute.xlu0 %590
        %592 = vrot.lane.b32.xlu0 %v585, 114
        %v593 = vpop.permute.xlu0 %592
        %594 = vrot.lane.b32.xlu0 %v586, 114
        %v595 = vpop.permute.xlu0 %594
        %vm596 = vcmp.lt.s32.totalorder %v299, 114
        %v597 = vsel %vm596, %v593, %v595
        %v598 = vsel %vm596, %v591, %v593
        %v599 = vld [vmem:[#allocation4] sm:$0x3]
        %601 = vset.pattern.permute.xlu0 29
        %602 = vperm.xlu0 %601, %v599
        %v603 = vpop.permute.xlu0 %602
        %v605 = vmul.f32 %v598, %v603
        %v606 = vmul.f32 %v597, %v603
        %v607 = vadd.f32 %v581, %v605
        %v608 = vadd.f32 %v582, %v606
        %609 = vst [vmem:[#allocation1] ss:$4 sm:$0xff] %v283
        %v610 = vld.sshfl [vmem:[#allocation1 + $0x8] sm:$0xff pattern:$0x73625140]
        %v611 = vld.sshfl [vmem:[#allocation1 + $0x10] sm:$0xff pattern:$0x73625140]
        %v612 = vld.sshfl [vmem:[#allocation1 + $0x18] sm:$0xff pattern:$0x73625140]
        %616 = vrot.lane.b32.xlu0 %v610, 98
        %v617 = vpop.permute.xlu0 %616
        %618 = vrot.lane.b32.xlu0 %v611, 98
        %v619 = vpop.permute.xlu0 %618
        %620 = vrot.lane.b32.xlu0 %v612, 98
        %v621 = vpop.permute.xlu0 %620
        %vm622 = vcmp.lt.s32.totalorder %v299, 98
        %v623 = vsel %vm622, %v619, %v621
        %v624 = vsel %vm622, %v617, %v619
        %v625 = vld [vmem:[#allocation4] sm:$0x3]
        %627 = vset.pattern.permute.xlu0 36
        %628 = vperm.xlu0 %627, %v625
        %v629 = vpop.permute.xlu0 %628
        %v631 = vmul.f32 %v624, %v629
        %v632 = vmul.f32 %v623, %v629
        %v633 = vadd.f32 %v607, %v631
        %v634 = vadd.f32 %v608, %v632
        %635 = vst [vmem:[#allocation1] ss:$4 sm:$0xff] %v283
        %v636 = vld.sshfl [vmem:[#allocation1 + $0x8] sm:$0xff pattern:$0x73625140]
        %v637 = vld.sshfl [vmem:[#allocation1 + $0x10] sm:$0xff pattern:$0x73625140]
        %v638 = vld.sshfl [vmem:[#allocation1 + $0x18] sm:$0xff pattern:$0x73625140]
        %642 = vrot.lane.b32.xlu0 %v636, 82
        %v643 = vpop.permute.xlu0 %642
        %644 = vrot.lane.b32.xlu0 %v637, 82
        %v645 = vpop.permute.xlu0 %644
        %646 = vrot.lane.b32.xlu0 %v638, 82
        %v647 = vpop.permute.xlu0 %646
        %vm648 = vcmp.lt.s32.totalorder %v299, 82
        %v649 = vsel %vm648, %v645, %v647
        %v650 = vsel %vm648, %v643, %v645
        %v651 = vld [vmem:[#allocation4] sm:$0x3]
        %653 = vset.pattern.permute.xlu0 43
        %654 = vperm.xlu0 %653, %v651
        %v655 = vpop.permute.xlu0 %654
        %v657 = vmul.f32 %v650, %v655
        %v658 = vmul.f32 %v649, %v655
        %v659 = vadd.f32 %v633, %v657
        %v660 = vadd.f32 %v634, %v658
        %s661 = scalar_lea.vmem [#allocation7], 1
        %v662 = vld [vmem:[%s661] ss:$8 sm:$0x3]
        %v664 = vperm.slane %v662, 0
        %v665 = vperm.slane %v662, 1
        %v668 = vmul.f32 %v659, %v664
        %v669 = vmul.f32 %v660, %v665
        %v670 = vadd.f32 %v477, %v668
        %v671 = vadd.f32 %v478, %v669
        %672 = vst [vmem:[#allocation1] ss:$4 sm:$0xff] %v283
        %v673 = vld.sshfl [vmem:[#allocation1] sm:$0xff pattern:$0x73625140]
        %v674 = vld.sshfl [vmem:[#allocation1 + $0x8] sm:$0xff pattern:$0x73625140]
        %v675 = vld.sshfl [vmem:[#allocation1 + $0x10] sm:$0xff pattern:$0x73625140]
        %679 = vrot.lane.b32.xlu0 %v673, 49
        %v680 = vpop.permute.xlu0 %679
        %681 = vrot.lane.b32.xlu0 %v674, 49
        %v682 = vpop.permute.xlu0 %681
        %683 = vrot.lane.b32.xlu0 %v675, 49
        %v684 = vpop.permute.xlu0 %683
        %vm685 = vcmp.lt.s32.totalorder %v299, 49
        %v686 = vsel %vm685, %v682, %v684
        %v687 = vsel %vm685, %v680, %v682
        %v688 = vld [vmem:[#allocation4] sm:$0x3]
        %690 = vset.pattern.permute.xlu0 2
        %691 = vperm.xlu0 %690, %v688
        %v692 = vpop.permute.xlu0 %691
        %v694 = vmul.f32 %v687, %v692
        %v695 = vmul.f32 %v686, %v692
        %v696 = vadd.f32 %v694, 0.0
        %v697 = vadd.f32 %v695, 0.0
        %698 = vst [vmem:[#allocation1] ss:$4 sm:$0xff] %v283
        %v699 = vld.sshfl [vmem:[#allocation1] sm:$0xff pattern:$0x73625140]
        %v700 = vld.sshfl [vmem:[#allocation1 + $0x8] sm:$0xff pattern:$0x73625140]
        %v701 = vld.sshfl [vmem:[#allocation1 + $0x10] sm:$0xff pattern:$0x73625140]
        %705 = vrot.lane.b32.xlu0 %v699, 33
        %v706 = vpop.permute.xlu0 %705
        %707 = vrot.lane.b32.xlu0 %v700, 33
        %v708 = vpop.permute.xlu0 %707
        %709 = vrot.lane.b32.xlu0 %v701, 33
        %v710 = vpop.permute.xlu0 %709
        %vm711 = vcmp.lt.s32.totalorder %v299, 33
        %v712 = vsel %vm711, %v708, %v710
        %v713 = vsel %vm711, %v706, %v708
        %v714 = vld [vmem:[#allocation4] sm:$0x3]
        %716 = vset.pattern.permute.xlu0 9
        %717 = vperm.xlu0 %716, %v714
        %v718 = vpop.permute.xlu0 %717
        %v720 = vmul.f32 %v713, %v718
        %v721 = vmul.f32 %v712, %v718
        %v722 = vadd.f32 %v696, %v720
        %v723 = vadd.f32 %v697, %v721
        %724 = vst [vmem:[#allocation1] ss:$4 sm:$0xff] %v283
        %v725 = vld.sshfl [vmem:[#allocation1] sm:$0xff pattern:$0x73625140]
        %v726 = vld.sshfl [vmem:[#allocation1 + $0x8] sm:$0xff pattern:$0x73625140]
        %v727 = vld.sshfl [vmem:[#allocation1 + $0x10] sm:$0xff pattern:$0x73625140]
        %731 = vrot.lane.b32.xlu0 %v725, 17
        %v732 = vpop.permute.xlu0 %731
        %733 = vrot.lane.b32.xlu0 %v726, 17
        %v734 = vpop.permute.xlu0 %733
        %735 = vrot.lane.b32.xlu0 %v727, 17
        %v736 = vpop.permute.xlu0 %735
        %vm737 = vcmp.lt.s32.totalorder %v299, 17
        %v738 = vsel %vm737, %v734, %v736
        %v739 = vsel %vm737, %v732, %v734
        %v740 = vld [vmem:[#allocation4] sm:$0x3]
        %742 = vset.pattern.permute.xlu0 16
        %743 = vperm.xlu0 %742, %v740
        %v744 = vpop.permute.xlu0 %743
        %v746 = vmul.f32 %v739, %v744
        %v747 = vmul.f32 %v738, %v744
        %v748 = vadd.f32 %v722, %v746
        %v749 = vadd.f32 %v723, %v747
        %750 = vst [vmem:[#allocation1] ss:$4 sm:$0xff] %v283
        %v751 = vld.sshfl [vmem:[#allocation1] sm:$0xff pattern:$0x73625140]
        %v752 = vld.sshfl [vmem:[#allocation1 + $0x8] sm:$0xff pattern:$0x73625140]
        %v753 = vld.sshfl [vmem:[#allocation1 + $0x10] sm:$0xff pattern:$0x73625140]
        %757 = vrot.lane.b32.xlu0 %v751, 1
        %v758 = vpop.permute.xlu0 %757
        %759 = vrot.lane.b32.xlu0 %v752, 1
        %v760 = vpop.permute.xlu0 %759
        %761 = vrot.lane.b32.xlu0 %v753, 1
        %v762 = vpop.permute.xlu0 %761
        %vm763 = vcmp.lt.s32.totalorder %v299, 1
        %v764 = vsel %vm763, %v760, %v762
        %v765 = vsel %vm763, %v758, %v760
        %v766 = vld [vmem:[#allocation4] sm:$0x3]
        %768 = vset.pattern.permute.xlu0 23
        %769 = vperm.xlu0 %768, %v766
        %v770 = vpop.permute.xlu0 %769
        %v772 = vmul.f32 %v765, %v770
        %v773 = vmul.f32 %v764, %v770
        %v774 = vadd.f32 %v748, %v772
        %v775 = vadd.f32 %v749, %v773
        %776 = vst [vmem:[#allocation1] ss:$4 sm:$0xff] %v283
        %v777 = vld.sshfl [vmem:[#allocation1 + $0x8] sm:$0xff pattern:$0x73625140]
        %v778 = vld.sshfl [vmem:[#allocation1 + $0x10] sm:$0xff pattern:$0x73625140]
        %v779 = vld.sshfl [vmem:[#allocation1 + $0x18] sm:$0xff pattern:$0x73625140]
        %783 = vrot.lane.b32.xlu0 %v777, 113
        %v784 = vpop.permute.xlu0 %783
        %785 = vrot.lane.b32.xlu0 %v778, 113
        %v786 = vpop.permute.xlu0 %785
        %787 = vrot.lane.b32.xlu0 %v779, 113
        %v788 = vpop.permute.xlu0 %787
        %vm789 = vcmp.lt.s32.totalorder %v299, 113
        %v790 = vsel %vm789, %v786, %v788
        %v791 = vsel %vm789, %v784, %v786
        %v792 = vld [vmem:[#allocation4] sm:$0x3]
        %794 = vset.pattern.permute.xlu0 30
        %795 = vperm.xlu0 %794, %v792
        %v796 = vpop.permute.xlu0 %795
        %v798 = vmul.f32 %v791, %v796
        %v799 = vmul.f32 %v790, %v796
        %v800 = vadd.f32 %v774, %v798
        %v801 = vadd.f32 %v775, %v799
        %802 = vst [vmem:[#allocation1] ss:$4 sm:$0xff] %v283
        %v803 = vld.sshfl [vmem:[#allocation1 + $0x8] sm:$0xff pattern:$0x73625140]
        %v804 = vld.sshfl [vmem:[#allocation1 + $0x10] sm:$0xff pattern:$0x73625140]
        %v805 = vld.sshfl [vmem:[#allocation1 + $0x18] sm:$0xff pattern:$0x73625140]
        %809 = vrot.lane.b32.xlu0 %v803, 97
        %v810 = vpop.permute.xlu0 %809
        %811 = vrot.lane.b32.xlu0 %v804, 97
        %v812 = vpop.permute.xlu0 %811
        %813 = vrot.lane.b32.xlu0 %v805, 97
        %v814 = vpop.permute.xlu0 %813
        %vm815 = vcmp.lt.s32.totalorder %v299, 97
        %v816 = vsel %vm815, %v812, %v814
        %v817 = vsel %vm815, %v810, %v812
        %v818 = vld [vmem:[#allocation4] sm:$0x3]
        %820 = vset.pattern.permute.xlu0 37
        %821 = vperm.xlu0 %820, %v818
        %v822 = vpop.permute.xlu0 %821
        %v824 = vmul.f32 %v817, %v822
        %v825 = vmul.f32 %v816, %v822
        %v826 = vadd.f32 %v800, %v824
        %v827 = vadd.f32 %v801, %v825
        %828 = vst [vmem:[#allocation1] ss:$4 sm:$0xff] %v283
        %v829 = vld.sshfl [vmem:[#allocation1 + $0x8] sm:$0xff pattern:$0x73625140]
        %v830 = vld.sshfl [vmem:[#allocation1 + $0x10] sm:$0xff pattern:$0x73625140]
        %v831 = vld.sshfl [vmem:[#allocation1 + $0x18] sm:$0xff pattern:$0x73625140]
        %835 = vrot.lane.b32.xlu0 %v829, 81
        %v836 = vpop.permute.xlu0 %835
        %837 = vrot.lane.b32.xlu0 %v830, 81
        %v838 = vpop.permute.xlu0 %837
        %839 = vrot.lane.b32.xlu0 %v831, 81
        %v840 = vpop.permute.xlu0 %839
        %vm841 = vcmp.lt.s32.totalorder %v299, 81
        %v842 = vsel %vm841, %v838, %v840
        %v843 = vsel %vm841, %v836, %v838
        %v844 = vld [vmem:[#allocation4] sm:$0x3]
        %846 = vset.pattern.permute.xlu0 44
        %847 = vperm.xlu0 %846, %v844
        %v848 = vpop.permute.xlu0 %847
        %v850 = vmul.f32 %v843, %v848
        %v851 = vmul.f32 %v842, %v848
        %v852 = vadd.f32 %v826, %v850
        %v853 = vadd.f32 %v827, %v851
        %s854 = scalar_lea.vmem [#allocation7], 2
        %v855 = vld [vmem:[%s854] ss:$8 sm:$0x3]
        %v857 = vperm.slane %v855, 0
        %v858 = vperm.slane %v855, 1
        %v861 = vmul.f32 %v852, %v857
        %v862 = vmul.f32 %v853, %v858
        %v863 = vadd.f32 %v670, %v861
        %v864 = vadd.f32 %v671, %v862
        %865 = vst [vmem:[#allocation1] ss:$4 sm:$0xff] %v283
        %v866 = vld.sshfl [vmem:[#allocation1] sm:$0xff pattern:$0x73625140]
        %v867 = vld.sshfl [vmem:[#allocation1 + $0x8] sm:$0xff pattern:$0x73625140]
        %v868 = vld.sshfl [vmem:[#allocation1 + $0x10] sm:$0xff pattern:$0x73625140]
        %872 = vrot.lane.b32.xlu0 %v866, 48
        %v873 = vpop.permute.xlu0 %872
        %874 = vrot.lane.b32.xlu0 %v867, 48
        %v875 = vpop.permute.xlu0 %874
        %876 = vrot.lane.b32.xlu0 %v868, 48
        %v877 = vpop.permute.xlu0 %876
        %vm878 = vcmp.lt.s32.totalorder %v299, 48
        %v879 = vsel %vm878, %v875, %v877
        %v880 = vsel %vm878, %v873, %v875
        %v881 = vld [vmem:[#allocation4] sm:$0x3]
        %883 = vset.pattern.permute.xlu0 3
        %884 = vperm.xlu0 %883, %v881
        %v885 = vpop.permute.xlu0 %884
        %v887 = vmul.f32 %v880, %v885
        %v888 = vmul.f32 %v879, %v885
        %v889 = vadd.f32 %v887, 0.0
        %v890 = vadd.f32 %v888, 0.0
        %891 = vst [vmem:[#allocation1] ss:$4 sm:$0xff] %v283
        %v892 = vld.sshfl [vmem:[#allocation1] sm:$0xff pattern:$0x73625140]
        %v893 = vld.sshfl [vmem:[#allocation1 + $0x8] sm:$0xff pattern:$0x73625140]
        %v894 = vld.sshfl [vmem:[#allocation1 + $0x10] sm:$0xff pattern:$0x73625140]
        %898 = vrot.lane.b32.xlu0 %v892, 32
        %v899 = vpop.permute.xlu0 %898
        %900 = vrot.lane.b32.xlu0 %v893, 32
        %v901 = vpop.permute.xlu0 %900
        %902 = vrot.lane.b32.xlu0 %v894, 32
        %v903 = vpop.permute.xlu0 %902
        %vm904 = vcmp.lt.s32.totalorder %v299, 32
        %v905 = vsel %vm904, %v901, %v903
        %v906 = vsel %vm904, %v899, %v901
        %v907 = vld [vmem:[#allocation4] sm:$0x3]
        %909 = vset.pattern.permute.xlu0 10
        %910 = vperm.xlu0 %909, %v907
        %v911 = vpop.permute.xlu0 %910
        %v913 = vmul.f32 %v906, %v911
        %v914 = vmul.f32 %v905, %v911
        %v915 = vadd.f32 %v889, %v913
        %v916 = vadd.f32 %v890, %v914
        %917 = vst [vmem:[#allocation1] ss:$4 sm:$0xff] %v283
        %v918 = vld.sshfl [vmem:[#allocation1] sm:$0xff pattern:$0x73625140]
        %v919 = vld.sshfl [vmem:[#allocation1 + $0x8] sm:$0xff pattern:$0x73625140]
        %v920 = vld.sshfl [vmem:[#allocation1 + $0x10] sm:$0xff pattern:$0x73625140]
        %924 = vrot.lane.b32.xlu0 %v918, 16
        %v925 = vpop.permute.xlu0 %924
        %926 = vrot.lane.b32.xlu0 %v919, 16
        %v927 = vpop.permute.xlu0 %926
        %928 = vrot.lane.b32.xlu0 %v920, 16
        %v929 = vpop.permute.xlu0 %928
        %vm930 = vcmp.lt.s32.totalorder %v299, 16
        %v931 = vsel %vm930, %v927, %v929
        %v932 = vsel %vm930, %v925, %v927
        %v933 = vld [vmem:[#allocation4] sm:$0x3]
        %935 = vset.pattern.permute.xlu0 17
        %936 = vperm.xlu0 %935, %v933
        %v937 = vpop.permute.xlu0 %936
        %v939 = vmul.f32 %v932, %v937
        %v940 = vmul.f32 %v931, %v937
        %v941 = vadd.f32 %v915, %v939
        %v942 = vadd.f32 %v916, %v940
        %943 = vst [vmem:[#allocation1] ss:$4 sm:$0xff] %v283
        %v944 = vld.sshfl [vmem:[#allocation1 + $0x8] sm:$0xff pattern:$0x73625140]
        %v945 = vld.sshfl [vmem:[#allocation1 + $0x10] sm:$0xff pattern:$0x73625140]
        %v948 = vld [vmem:[#allocation4] sm:$0x3]
        %950 = vset.pattern.permute.xlu0 24
        %951 = vperm.xlu0 %950, %v948
        %v952 = vpop.permute.xlu0 %951
        %v954 = vmul.f32 %v944, %v952
        %v955 = vmul.f32 %v945, %v952
        %v956 = vadd.f32 %v941, %v954
        %v957 = vadd.f32 %v942, %v955
        %958 = vst [vmem:[#allocation1] ss:$4 sm:$0xff] %v283
        %v959 = vld.sshfl [vmem:[#allocation1 + $0x8] sm:$0xff pattern:$0x73625140]
        %v960 = vld.sshfl [vmem:[#allocation1 + $0x10] sm:$0xff pattern:$0x73625140]
        %v961 = vld.sshfl [vmem:[#allocation1 + $0x18] sm:$0xff pattern:$0x73625140]
        %965 = vrot.lane.b32.xlu0 %v959, 112
        %v966 = vpop.permute.xlu0 %965
        %967 = vrot.lane.b32.xlu0 %v960, 112
        %v968 = vpop.permute.xlu0 %967
        %969 = vrot.lane.b32.xlu0 %v961, 112
        %v970 = vpop.permute.xlu0 %969
        %vm971 = vcmp.lt.s32.totalorder %v299, 112
        %v972 = vsel %vm971, %v968, %v970
        %v973 = vsel %vm971, %v966, %v968
        %v974 = vld [vmem:[#allocation4] sm:$0x3]
        %976 = vset.pattern.permute.xlu0 31
        %977 = vperm.xlu0 %976, %v974
        %v978 = vpop.permute.xlu0 %977
        %v980 = vmul.f32 %v973, %v978
        %v981 = vmul.f32 %v972, %v978
        %v982 = vadd.f32 %v956, %v980
        %v983 = vadd.f32 %v957, %v981
        %984 = vst [vmem:[#allocation1] ss:$4 sm:$0xff] %v283
        %v985 = vld.sshfl [vmem:[#allocation1 + $0x8] sm:$0xff pattern:$0x73625140]
        %v986 = vld.sshfl [vmem:[#allocation1 + $0x10] sm:$0xff pattern:$0x73625140]
        %v987 = vld.sshfl [vmem:[#allocation1 + $0x18] sm:$0xff pattern:$0x73625140]
        %991 = vrot.lane.b32.xlu0 %v985, 96
        %v992 = vpop.permute.xlu0 %991
        %993 = vrot.lane.b32.xlu0 %v986, 96
        %v994 = vpop.permute.xlu0 %993
        %995 = vrot.lane.b32.xlu0 %v987, 96
        %v996 = vpop.permute.xlu0 %995
        %vm997 = vcmp.lt.s32.totalorder %v299, 96
        %v998 = vsel %vm997, %v994, %v996
        %v999 = vsel %vm997, %v992, %v994
        %v1000 = vld [vmem:[#allocation4] sm:$0x3]
        %1002 = vset.pattern.permute.xlu0 38
        %1003 = vperm.xlu0 %1002, %v1000
        %v1004 = vpop.permute.xlu0 %1003
        %v1006 = vmul.f32 %v999, %v1004
        %v1007 = vmul.f32 %v998, %v1004
        %v1008 = vadd.f32 %v982, %v1006
        %v1009 = vadd.f32 %v983, %v1007
        %1010 = vst [vmem:[#allocation1] ss:$4 sm:$0xff] %v283
        %v1011 = vld.sshfl [vmem:[#allocation1 + $0x8] sm:$0xff pattern:$0x73625140]
        %v1012 = vld.sshfl [vmem:[#allocation1 + $0x10] sm:$0xff pattern:$0x73625140]
        %v1013 = vld.sshfl [vmem:[#allocation1 + $0x18] sm:$0xff pattern:$0x73625140]
        %1017 = vrot.lane.b32.xlu0 %v1011, 80
        %v1018 = vpop.permute.xlu0 %1017
        %1019 = vrot.lane.b32.xlu0 %v1012, 80
        %v1020 = vpop.permute.xlu0 %1019
        %1021 = vrot.lane.b32.xlu0 %v1013, 80
        %v1022 = vpop.permute.xlu0 %1021
        %vm1023 = vcmp.lt.s32.totalorder %v299, 80
        %v1024 = vsel %vm1023, %v1020, %v1022
        %v1025 = vsel %vm1023, %v1018, %v1020
        %v1026 = vld [vmem:[#allocation4] sm:$0x3]
        %1028 = vset.pattern.permute.xlu0 45
        %1029 = vperm.xlu0 %1028, %v1026
        %v1030 = vpop.permute.xlu0 %1029
        %v1032 = vmul.f32 %v1025, %v1030
        %v1033 = vmul.f32 %v1024, %v1030
        %v1034 = vadd.f32 %v1008, %v1032
        %v1035 = vadd.f32 %v1009, %v1033
        %s1036 = scalar_lea.vmem [#allocation7], 3
        %v1037 = vld [vmem:[%s1036] ss:$8 sm:$0x3]
        %v1039 = vperm.slane %v1037, 0
        %v1040 = vperm.slane %v1037, 1
        %v1043 = vmul.f32 %v1034, %v1039
        %v1044 = vmul.f32 %v1035, %v1040
        %v1045 = vadd.f32 %v863, %v1043
        %v1046 = vadd.f32 %v864, %v1044
        %1047 = vst [vmem:[#allocation1] ss:$4 sm:$0xff] %v283
        %v1048 = vld.sshfl [vmem:[#allocation1] sm:$0xff pattern:$0x73625140]
        %v1049 = vld.sshfl [vmem:[#allocation1 + $0x8] sm:$0xff pattern:$0x73625140]
        %v1050 = vld.sshfl [vmem:[#allocation1 + $0x10] sm:$0xff pattern:$0x73625140]
        %1054 = vrot.lane.b32.xlu0 %v1048, 47
        %v1055 = vpop.permute.xlu0 %1054
        %1056 = vrot.lane.b32.xlu0 %v1049, 47
        %v1057 = vpop.permute.xlu0 %1056
        %1058 = vrot.lane.b32.xlu0 %v1050, 47
        %v1059 = vpop.permute.xlu0 %1058
        %vm1060 = vcmp.lt.s32.totalorder %v299, 47
        %v1061 = vsel %vm1060, %v1057, %v1059
        %v1062 = vsel %vm1060, %v1055, %v1057
        %v1063 = vld [vmem:[#allocation4] sm:$0x3]
        %1065 = vset.pattern.permute.xlu0 4
        %1066 = vperm.xlu0 %1065, %v1063
        %v1067 = vpop.permute.xlu0 %1066
        %v1069 = vmul.f32 %v1062, %v1067
        %v1070 = vmul.f32 %v1061, %v1067
        %v1071 = vadd.f32 %v1069, 0.0
        %v1072 = vadd.f32 %v1070, 0.0
        %1073 = vst [vmem:[#allocation1] ss:$4 sm:$0xff] %v283
        %v1074 = vld.sshfl [vmem:[#allocation1] sm:$0xff pattern:$0x73625140]
        %v1075 = vld.sshfl [vmem:[#allocation1 + $0x8] sm:$0xff pattern:$0x73625140]
        %v1076 = vld.sshfl [vmem:[#allocation1 + $0x10] sm:$0xff pattern:$0x73625140]
        %1080 = vrot.lane.b32.xlu0 %v1074, 31
        %v1081 = vpop.permute.xlu0 %1080
        %1082 = vrot.lane.b32.xlu0 %v1075, 31
        %v1083 = vpop.permute.xlu0 %1082
        %1084 = vrot.lane.b32.xlu0 %v1076, 31
        %v1085 = vpop.permute.xlu0 %1084
        %vm1086 = vcmp.lt.s32.totalorder %v299, 31
        %v1087 = vsel %vm1086, %v1083, %v1085
        %v1088 = vsel %vm1086, %v1081, %v1083
        %v1089 = vld [vmem:[#allocation4] sm:$0x3]
        %1091 = vset.pattern.permute.xlu0 11
        %1092 = vperm.xlu0 %1091, %v1089
        %v1093 = vpop.permute.xlu0 %1092
        %v1095 = vmul.f32 %v1088, %v1093
        %v1096 = vmul.f32 %v1087, %v1093
        %v1097 = vadd.f32 %v1071, %v1095
        %v1098 = vadd.f32 %v1072, %v1096
        %1099 = vst [vmem:[#allocation1] ss:$4 sm:$0xff] %v283
        %v1100 = vld.sshfl [vmem:[#allocation1] sm:$0xff pattern:$0x73625140]
        %v1101 = vld.sshfl [vmem:[#allocation1 + $0x8] sm:$0xff pattern:$0x73625140]
        %v1102 = vld.sshfl [vmem:[#allocation1 + $0x10] sm:$0xff pattern:$0x73625140]
        %1106 = vrot.lane.b32.xlu0 %v1100, 15
        %v1107 = vpop.permute.xlu0 %1106
        %1108 = vrot.lane.b32.xlu0 %v1101, 15
        %v1109 = vpop.permute.xlu0 %1108
        %1110 = vrot.lane.b32.xlu0 %v1102, 15
        %v1111 = vpop.permute.xlu0 %1110
        %vm1112 = vcmp.lt.s32.totalorder %v299, 15
        %v1113 = vsel %vm1112, %v1109, %v1111
        %v1114 = vsel %vm1112, %v1107, %v1109
        %v1115 = vld [vmem:[#allocation4] sm:$0x3]
        %1117 = vset.pattern.permute.xlu0 18
        %1118 = vperm.xlu0 %1117, %v1115
        %v1119 = vpop.permute.xlu0 %1118
        %v1121 = vmul.f32 %v1114, %v1119
        %v1122 = vmul.f32 %v1113, %v1119
        %v1123 = vadd.f32 %v1097, %v1121
        %v1124 = vadd.f32 %v1098, %v1122
        %1125 = vst [vmem:[#allocation1] ss:$4 sm:$0xff] %v283
        %v1126 = vld.sshfl [vmem:[#allocation1 + $0x8] sm:$0xff pattern:$0x73625140]
        %v1127 = vld.sshfl [vmem:[#allocation1 + $0x10] sm:$0xff pattern:$0x73625140]
        %v1128 = vld.sshfl [vmem:[#allocation1 + $0x18] sm:$0xff pattern:$0x73625140]
        %1132 = vrot.lane.b32.xlu0 %v1126, 127
        %v1133 = vpop.permute.xlu0 %1132
        %1134 = vrot.lane.b32.xlu0 %v1127, 127
        %v1135 = vpop.permute.xlu0 %1134
        %1136 = vrot.lane.b32.xlu0 %v1128, 127
        %v1137 = vpop.permute.xlu0 %1136
        %vm1138 = vcmp.lt.s32.totalorder %v299, 127
        %v1139 = vsel %vm1138, %v1135, %v1137
        %v1140 = vsel %vm1138, %v1133, %v1135
        %v1141 = vld [vmem:[#allocation4] sm:$0x3]
        %1143 = vset.pattern.permute.xlu0 25
        %1144 = vperm.xlu0 %1143, %v1141
        %v1145 = vpop.permute.xlu0 %1144
        %v1147 = vmul.f32 %v1140, %v1145
        %v1148 = vmul.f32 %v1139, %v1145
        %v1149 = vadd.f32 %v1123, %v1147
        %v1150 = vadd.f32 %v1124, %v1148
        %1151 = vst [vmem:[#allocation1] ss:$4 sm:$0xff] %v283
        %v1152 = vld.sshfl [vmem:[#allocation1 + $0x8] sm:$0xff pattern:$0x73625140]
        %v1153 = vld.sshfl [vmem:[#allocation1 + $0x10] sm:$0xff pattern:$0x73625140]
        %v1154 = vld.sshfl [vmem:[#allocation1 + $0x18] sm:$0xff pattern:$0x73625140]
        %1158 = vrot.lane.b32.xlu0 %v1152, 111
        %v1159 = vpop.permute.xlu0 %1158
        %1160 = vrot.lane.b32.xlu0 %v1153, 111
        %v1161 = vpop.permute.xlu0 %1160
        %1162 = vrot.lane.b32.xlu0 %v1154, 111
        %v1163 = vpop.permute.xlu0 %1162
        %vm1164 = vcmp.lt.s32.totalorder %v299, 111
        %v1165 = vsel %vm1164, %v1161, %v1163
        %v1166 = vsel %vm1164, %v1159, %v1161
        %v1167 = vld [vmem:[#allocation4] sm:$0x3]
        %1169 = vset.pattern.permute.xlu0 32
        %1170 = vperm.xlu0 %1169, %v1167
        %v1171 = vpop.permute.xlu0 %1170
        %v1173 = vmul.f32 %v1166, %v1171
        %v1174 = vmul.f32 %v1165, %v1171
        %v1175 = vadd.f32 %v1149, %v1173
        %v1176 = vadd.f32 %v1150, %v1174
        %1177 = vst [vmem:[#allocation1] ss:$4 sm:$0xff] %v283
        %v1178 = vld.sshfl [vmem:[#allocation1 + $0x8] sm:$0xff pattern:$0x73625140]
        %v1179 = vld.sshfl [vmem:[#allocation1 + $0x10] sm:$0xff pattern:$0x73625140]
        %v1180 = vld.sshfl [vmem:[#allocation1 + $0x18] sm:$0xff pattern:$0x73625140]
        %1184 = vrot.lane.b32.xlu0 %v1178, 95
        %v1185 = vpop.permute.xlu0 %1184
        %1186 = vrot.lane.b32.xlu0 %v1179, 95
        %v1187 = vpop.permute.xlu0 %1186
        %1188 = vrot.lane.b32.xlu0 %v1180, 95
        %v1189 = vpop.permute.xlu0 %1188
        %vm1190 = vcmp.lt.s32.totalorder %v299, 95
        %v1191 = vsel %vm1190, %v1187, %v1189
        %v1192 = vsel %vm1190, %v1185, %v1187
        %v1193 = vld [vmem:[#allocation4] sm:$0x3]
        %1195 = vset.pattern.permute.xlu0 39
        %1196 = vperm.xlu0 %1195, %v1193
        %v1197 = vpop.permute.xlu0 %1196
        %v1199 = vmul.f32 %v1192, %v1197
        %v1200 = vmul.f32 %v1191, %v1197
        %v1201 = vadd.f32 %v1175, %v1199
        %v1202 = vadd.f32 %v1176, %v1200
        %1203 = vst [vmem:[#allocation1] ss:$4 sm:$0xff] %v283
        %v1204 = vld.sshfl [vmem:[#allocation1 + $0x8] sm:$0xff pattern:$0x73625140]
        %v1205 = vld.sshfl [vmem:[#allocation1 + $0x10] sm:$0xff pattern:$0x73625140]
        %v1206 = vld.sshfl [vmem:[#allocation1 + $0x18] sm:$0xff pattern:$0x73625140]
        %1210 = vrot.lane.b32.xlu0 %v1204, 79
        %v1211 = vpop.permute.xlu0 %1210
        %1212 = vrot.lane.b32.xlu0 %v1205, 79
        %v1213 = vpop.permute.xlu0 %1212
        %1214 = vrot.lane.b32.xlu0 %v1206, 79
        %v1215 = vpop.permute.xlu0 %1214
        %vm1216 = vcmp.lt.s32.totalorder %v299, 79
        %v1217 = vsel %vm1216, %v1213, %v1215
        %v1218 = vsel %vm1216, %v1211, %v1213
        %v1219 = vld [vmem:[#allocation4] sm:$0x3]
        %1221 = vset.pattern.permute.xlu0 46
        %1222 = vperm.xlu0 %1221, %v1219
        %v1223 = vpop.permute.xlu0 %1222
        %v1225 = vmul.f32 %v1218, %v1223
        %v1226 = vmul.f32 %v1217, %v1223
        %v1227 = vadd.f32 %v1201, %v1225
        %v1228 = vadd.f32 %v1202, %v1226
        %s1229 = scalar_lea.vmem [#allocation7], 4
        %v1230 = vld [vmem:[%s1229] ss:$8 sm:$0x3]
        %v1232 = vperm.slane %v1230, 0
        %v1233 = vperm.slane %v1230, 1
        %v1236 = vmul.f32 %v1227, %v1232
        %v1237 = vmul.f32 %v1228, %v1233
        %v1238 = vadd.f32 %v1045, %v1236
        %v1239 = vadd.f32 %v1046, %v1237
        %1240 = vst [vmem:[#allocation1] ss:$4 sm:$0xff] %v283
        %v1241 = vld.sshfl [vmem:[#allocation1] sm:$0xff pattern:$0x73625140]
        %v1242 = vld.sshfl [vmem:[#allocation1 + $0x8] sm:$0xff pattern:$0x73625140]
        %v1243 = vld.sshfl [vmem:[#allocation1 + $0x10] sm:$0xff pattern:$0x73625140]
        %1247 = vrot.lane.b32.xlu0 %v1241, 46
        %v1248 = vpop.permute.xlu0 %1247
        %1249 = vrot.lane.b32.xlu0 %v1242, 46
        %v1250 = vpop.permute.xlu0 %1249
        %1251 = vrot.lane.b32.xlu0 %v1243, 46
        %v1252 = vpop.permute.xlu0 %1251
        %vm1253 = vcmp.lt.s32.totalorder %v299, 46
        %v1254 = vsel %vm1253, %v1250, %v1252
        %v1255 = vsel %vm1253, %v1248, %v1250
        %v1256 = vld [vmem:[#allocation4] sm:$0x3]
        %1258 = vset.pattern.permute.xlu0 5
        %1259 = vperm.xlu0 %1258, %v1256
        %v1260 = vpop.permute.xlu0 %1259
        %v1262 = vmul.f32 %v1255, %v1260
        %v1263 = vmul.f32 %v1254, %v1260
        %v1264 = vadd.f32 %v1262, 0.0
        %v1265 = vadd.f32 %v1263, 0.0
        %1266 = vst [vmem:[#allocation1] ss:$4 sm:$0xff] %v283
        %v1267 = vld.sshfl [vmem:[#allocation1] sm:$0xff pattern:$0x73625140]
        %v1268 = vld.sshfl [vmem:[#allocation1 + $0x8] sm:$0xff pattern:$0x73625140]
        %v1269 = vld.sshfl [vmem:[#allocation1 + $0x10] sm:$0xff pattern:$0x73625140]
        %1273 = vrot.lane.b32.xlu0 %v1267, 30
        %v1274 = vpop.permute.xlu0 %1273
        %1275 = vrot.lane.b32.xlu0 %v1268, 30
        %v1276 = vpop.permute.xlu0 %1275
        %1277 = vrot.lane.b32.xlu0 %v1269, 30
        %v1278 = vpop.permute.xlu0 %1277
        %vm1279 = vcmp.lt.s32.totalorder %v299, 30
        %v1280 = vsel %vm1279, %v1276, %v1278
        %v1281 = vsel %vm1279, %v1274, %v1276
        %v1282 = vld [vmem:[#allocation4] sm:$0x3]
        %1284 = vset.pattern.permute.xlu0 12
        %1285 = vperm.xlu0 %1284, %v1282
        %v1286 = vpop.permute.xlu0 %1285
        %v1288 = vmul.f32 %v1281, %v1286
        %v1289 = vmul.f32 %v1280, %v1286
        %v1290 = vadd.f32 %v1264, %v1288
        %v1291 = vadd.f32 %v1265, %v1289
        %1292 = vst [vmem:[#allocation1] ss:$4 sm:$0xff] %v283
        %v1293 = vld.sshfl [vmem:[#allocation1] sm:$0xff pattern:$0x73625140]
        %v1294 = vld.sshfl [vmem:[#allocation1 + $0x8] sm:$0xff pattern:$0x73625140]
        %v1295 = vld.sshfl [vmem:[#allocation1 + $0x10] sm:$0xff pattern:$0x73625140]
        %1299 = vrot.lane.b32.xlu0 %v1293, 14
        %v1300 = vpop.permute.xlu0 %1299
        %1301 = vrot.lane.b32.xlu0 %v1294, 14
        %v1302 = vpop.permute.xlu0 %1301
        %1303 = vrot.lane.b32.xlu0 %v1295, 14
        %v1304 = vpop.permute.xlu0 %1303
        %vm1305 = vcmp.lt.s32.totalorder %v299, 14
        %v1306 = vsel %vm1305, %v1302, %v1304
        %v1307 = vsel %vm1305, %v1300, %v1302
        %v1308 = vld [vmem:[#allocation4] sm:$0x3]
        %1310 = vset.pattern.permute.xlu0 19
        %1311 = vperm.xlu0 %1310, %v1308
        %v1312 = vpop.permute.xlu0 %1311
        %v1314 = vmul.f32 %v1307, %v1312
        %v1315 = vmul.f32 %v1306, %v1312
        %v1316 = vadd.f32 %v1290, %v1314
        %v1317 = vadd.f32 %v1291, %v1315
        %1318 = vst [vmem:[#allocation1] ss:$4 sm:$0xff] %v283
        %v1319 = vld.sshfl [vmem:[#allocation1 + $0x8] sm:$0xff pattern:$0x73625140]
        %v1320 = vld.sshfl [vmem:[#allocation1 + $0x10] sm:$0xff pattern:$0x73625140]
        %v1321 = vld.sshfl [vmem:[#allocation1 + $0x18] sm:$0xff pattern:$0x73625140]
        %1325 = vrot.lane.b32.xlu0 %v1319, 126
        %v1326 = vpop.permute.xlu0 %1325
        %1327 = vrot.lane.b32.xlu0 %v1320, 126
        %v1328 = vpop.permute.xlu0 %1327
        %1329 = vrot.lane.b32.xlu0 %v1321, 126
        %v1330 = vpop.permute.xlu0 %1329
        %vm1331 = vcmp.lt.s32.totalorder %v299, 126
        %v1332 = vsel %vm1331, %v1328, %v1330
        %v1333 = vsel %vm1331, %v1326, %v1328
        %v1334 = vld [vmem:[#allocation4] sm:$0x3]
        %1336 = vset.pattern.permute.xlu0 26
        %1337 = vperm.xlu0 %1336, %v1334
        %v1338 = vpop.permute.xlu0 %1337
        %v1340 = vmul.f32 %v1333, %v1338
        %v1341 = vmul.f32 %v1332, %v1338
        %v1342 = vadd.f32 %v1316, %v1340
        %v1343 = vadd.f32 %v1317, %v1341
        %1344 = vst [vmem:[#allocation1] ss:$4 sm:$0xff] %v283
        %v1345 = vld.sshfl [vmem:[#allocation1 + $0x8] sm:$0xff pattern:$0x73625140]
        %v1346 = vld.sshfl [vmem:[#allocation1 + $0x10] sm:$0xff pattern:$0x73625140]
        %v1347 = vld.sshfl [vmem:[#allocation1 + $0x18] sm:$0xff pattern:$0x73625140]
        %1351 = vrot.lane.b32.xlu0 %v1345, 110
        %v1352 = vpop.permute.xlu0 %1351
        %1353 = vrot.lane.b32.xlu0 %v1346, 110
        %v1354 = vpop.permute.xlu0 %1353
        %1355 = vrot.lane.b32.xlu0 %v1347, 110
        %v1356 = vpop.permute.xlu0 %1355
        %vm1357 = vcmp.lt.s32.totalorder %v299, 110
        %v1358 = vsel %vm1357, %v1354, %v1356
        %v1359 = vsel %vm1357, %v1352, %v1354
        %v1360 = vld [vmem:[#allocation4] sm:$0x3]
        %1362 = vset.pattern.permute.xlu0 33
        %1363 = vperm.xlu0 %1362, %v1360
        %v1364 = vpop.permute.xlu0 %1363
        %v1366 = vmul.f32 %v1359, %v1364
        %v1367 = vmul.f32 %v1358, %v1364
        %v1368 = vadd.f32 %v1342, %v1366
        %v1369 = vadd.f32 %v1343, %v1367
        %1370 = vst [vmem:[#allocation1] ss:$4 sm:$0xff] %v283
        %v1371 = vld.sshfl [vmem:[#allocation1 + $0x8] sm:$0xff pattern:$0x73625140]
        %v1372 = vld.sshfl [vmem:[#allocation1 + $0x10] sm:$0xff pattern:$0x73625140]
        %v1373 = vld.sshfl [vmem:[#allocation1 + $0x18] sm:$0xff pattern:$0x73625140]
        %1377 = vrot.lane.b32.xlu0 %v1371, 94
        %v1378 = vpop.permute.xlu0 %1377
        %1379 = vrot.lane.b32.xlu0 %v1372, 94
        %v1380 = vpop.permute.xlu0 %1379
        %1381 = vrot.lane.b32.xlu0 %v1373, 94
        %v1382 = vpop.permute.xlu0 %1381
        %vm1383 = vcmp.lt.s32.totalorder %v299, 94
        %v1384 = vsel %vm1383, %v1380, %v1382
        %v1385 = vsel %vm1383, %v1378, %v1380
        %v1386 = vld [vmem:[#allocation4] sm:$0x3]
        %1388 = vset.pattern.permute.xlu0 40
        %1389 = vperm.xlu0 %1388, %v1386
        %v1390 = vpop.permute.xlu0 %1389
        %v1392 = vmul.f32 %v1385, %v1390
        %v1393 = vmul.f32 %v1384, %v1390
        %v1394 = vadd.f32 %v1368, %v1392
        %v1395 = vadd.f32 %v1369, %v1393
        %1396 = vst [vmem:[#allocation1] ss:$4 sm:$0xff] %v283
        %v1397 = vld.sshfl [vmem:[#allocation1 + $0x8] sm:$0xff pattern:$0x73625140]
        %v1398 = vld.sshfl [vmem:[#allocation1 + $0x10] sm:$0xff pattern:$0x73625140]
        %v1399 = vld.sshfl [vmem:[#allocation1 + $0x18] sm:$0xff pattern:$0x73625140]
        %1403 = vrot.lane.b32.xlu0 %v1397, 78
        %v1404 = vpop.permute.xlu0 %1403
        %1405 = vrot.lane.b32.xlu0 %v1398, 78
        %v1406 = vpop.permute.xlu0 %1405
        %1407 = vrot.lane.b32.xlu0 %v1399, 78
        %v1408 = vpop.permute.xlu0 %1407
        %vm1409 = vcmp.lt.s32.totalorder %v299, 78
        %v1410 = vsel %vm1409, %v1406, %v1408
        %v1411 = vsel %vm1409, %v1404, %v1406
        %v1412 = vld [vmem:[#allocation4] sm:$0x3]
        %1414 = vset.pattern.permute.xlu0 47
        %1415 = vperm.xlu0 %1414, %v1412
        %v1416 = vpop.permute.xlu0 %1415
        %v1418 = vmul.f32 %v1411, %v1416
        %v1419 = vmul.f32 %v1410, %v1416
        %v1420 = vadd.f32 %v1394, %v1418
        %v1421 = vadd.f32 %v1395, %v1419
        %s1422 = scalar_lea.vmem [#allocation7], 5
        %v1423 = vld [vmem:[%s1422] ss:$8 sm:$0x3]
        %v1425 = vperm.slane %v1423, 0
        %v1426 = vperm.slane %v1423, 1
        %v1429 = vmul.f32 %v1420, %v1425
        %v1430 = vmul.f32 %v1421, %v1426
        %v1431 = vadd.f32 %v1238, %v1429
        %v1432 = vadd.f32 %v1239, %v1430
        %1433 = vst [vmem:[#allocation1] ss:$4 sm:$0xff] %v283
        %v1434 = vld.sshfl [vmem:[#allocation1] sm:$0xff pattern:$0x73625140]
        %v1435 = vld.sshfl [vmem:[#allocation1 + $0x8] sm:$0xff pattern:$0x73625140]
        %v1436 = vld.sshfl [vmem:[#allocation1 + $0x10] sm:$0xff pattern:$0x73625140]
        %1440 = vrot.lane.b32.xlu0 %v1434, 45
        %v1441 = vpop.permute.xlu0 %1440
        %1442 = vrot.lane.b32.xlu0 %v1435, 45
        %v1443 = vpop.permute.xlu0 %1442
        %1444 = vrot.lane.b32.xlu0 %v1436, 45
        %v1445 = vpop.permute.xlu0 %1444
        %vm1446 = vcmp.lt.s32.totalorder %v299, 45
        %v1447 = vsel %vm1446, %v1443, %v1445
        %v1448 = vsel %vm1446, %v1441, %v1443
        %v1449 = vld [vmem:[#allocation4] sm:$0x3]
        %1451 = vset.pattern.permute.xlu0 6
        %1452 = vperm.xlu0 %1451, %v1449
        %v1453 = vpop.permute.xlu0 %1452
        %v1455 = vmul.f32 %v1448, %v1453
        %v1456 = vmul.f32 %v1447, %v1453
        %v1457 = vadd.f32 %v1455, 0.0
        %v1458 = vadd.f32 %v1456, 0.0
        %1459 = vst [vmem:[#allocation1] ss:$4 sm:$0xff] %v283
        %v1460 = vld.sshfl [vmem:[#allocation1] sm:$0xff pattern:$0x73625140]
        %v1461 = vld.sshfl [vmem:[#allocation1 + $0x8] sm:$0xff pattern:$0x73625140]
        %v1462 = vld.sshfl [vmem:[#allocation1 + $0x10] sm:$0xff pattern:$0x73625140]
        %1466 = vrot.lane.b32.xlu0 %v1460, 29
        %v1467 = vpop.permute.xlu0 %1466
        %1468 = vrot.lane.b32.xlu0 %v1461, 29
        %v1469 = vpop.permute.xlu0 %1468
        %1470 = vrot.lane.b32.xlu0 %v1462, 29
        %v1471 = vpop.permute.xlu0 %1470
        %vm1472 = vcmp.lt.s32.totalorder %v299, 29
        %v1473 = vsel %vm1472, %v1469, %v1471
        %v1474 = vsel %vm1472, %v1467, %v1469
        %v1475 = vld [vmem:[#allocation4] sm:$0x3]
        %1477 = vset.pattern.permute.xlu0 13
        %1478 = vperm.xlu0 %1477, %v1475
        %v1479 = vpop.permute.xlu0 %1478
        %v1481 = vmul.f32 %v1474, %v1479
        %v1482 = vmul.f32 %v1473, %v1479
        %v1483 = vadd.f32 %v1457, %v1481
        %v1484 = vadd.f32 %v1458, %v1482
        %1485 = vst [vmem:[#allocation1] ss:$4 sm:$0xff] %v283
        %v1486 = vld.sshfl [vmem:[#allocation1] sm:$0xff pattern:$0x73625140]
        %v1487 = vld.sshfl [vmem:[#allocation1 + $0x8] sm:$0xff pattern:$0x73625140]
        %v1488 = vld.sshfl [vmem:[#allocation1 + $0x10] sm:$0xff pattern:$0x73625140]
        %1492 = vrot.lane.b32.xlu0 %v1486, 13
        %v1493 = vpop.permute.xlu0 %1492
        %1494 = vrot.lane.b32.xlu0 %v1487, 13
        %v1495 = vpop.permute.xlu0 %1494
        %1496 = vrot.lane.b32.xlu0 %v1488, 13
        %v1497 = vpop.permute.xlu0 %1496
        %vm1498 = vcmp.lt.s32.totalorder %v299, 13
        %v1499 = vsel %vm1498, %v1495, %v1497
        %v1500 = vsel %vm1498, %v1493, %v1495
        %v1501 = vld [vmem:[#allocation4] sm:$0x3]
        %1503 = vset.pattern.permute.xlu0 20
        %1504 = vperm.xlu0 %1503, %v1501
        %v1505 = vpop.permute.xlu0 %1504
        %v1507 = vmul.f32 %v1500, %v1505
        %v1508 = vmul.f32 %v1499, %v1505
        %v1509 = vadd.f32 %v1483, %v1507
        %v1510 = vadd.f32 %v1484, %v1508
        %1511 = vst [vmem:[#allocation1] ss:$4 sm:$0xff] %v283
        %v1512 = vld.sshfl [vmem:[#allocation1 + $0x8] sm:$0xff pattern:$0x73625140]
        %v1513 = vld.sshfl [vmem:[#allocation1 + $0x10] sm:$0xff pattern:$0x73625140]
        %v1514 = vld.sshfl [vmem:[#allocation1 + $0x18] sm:$0xff pattern:$0x73625140]
        %1518 = vrot.lane.b32.xlu0 %v1512, 125
        %v1519 = vpop.permute.xlu0 %1518
        %1520 = vrot.lane.b32.xlu0 %v1513, 125
        %v1521 = vpop.permute.xlu0 %1520
        %1522 = vrot.lane.b32.xlu0 %v1514, 125
        %v1523 = vpop.permute.xlu0 %1522
        %vm1524 = vcmp.lt.s32.totalorder %v299, 125
        %v1525 = vsel %vm1524, %v1521, %v1523
        %v1526 = vsel %vm1524, %v1519, %v1521
        %v1527 = vld [vmem:[#allocation4] sm:$0x3]
        %1529 = vset.pattern.permute.xlu0 27
        %1530 = vperm.xlu0 %1529, %v1527
        %v1531 = vpop.permute.xlu0 %1530
        %v1533 = vmul.f32 %v1526, %v1531
        %v1534 = vmul.f32 %v1525, %v1531
        %v1535 = vadd.f32 %v1509, %v1533
        %v1536 = vadd.f32 %v1510, %v1534
        %1537 = vst [vmem:[#allocation1] ss:$4 sm:$0xff] %v283
        %v1538 = vld.sshfl [vmem:[#allocation1 + $0x8] sm:$0xff pattern:$0x73625140]
        %v1539 = vld.sshfl [vmem:[#allocation1 + $0x10] sm:$0xff pattern:$0x73625140]
        %v1540 = vld.sshfl [vmem:[#allocation1 + $0x18] sm:$0xff pattern:$0x73625140]
        %1544 = vrot.lane.b32.xlu0 %v1538, 109
        %v1545 = vpop.permute.xlu0 %1544
        %1546 = vrot.lane.b32.xlu0 %v1539, 109
        %v1547 = vpop.permute.xlu0 %1546
        %1548 = vrot.lane.b32.xlu0 %v1540, 109
        %v1549 = vpop.permute.xlu0 %1548
        %vm1550 = vcmp.lt.s32.totalorder %v299, 109
        %v1551 = vsel %vm1550, %v1547, %v1549
        %v1552 = vsel %vm1550, %v1545, %v1547
        %v1553 = vld [vmem:[#allocation4] sm:$0x3]
        %1555 = vset.pattern.permute.xlu0 34
        %1556 = vperm.xlu0 %1555, %v1553
        %v1557 = vpop.permute.xlu0 %1556
        %v1559 = vmul.f32 %v1552, %v1557
        %v1560 = vmul.f32 %v1551, %v1557
        %v1561 = vadd.f32 %v1535, %v1559
        %v1562 = vadd.f32 %v1536, %v1560
        %1563 = vst [vmem:[#allocation1] ss:$4 sm:$0xff] %v283
        %v1564 = vld.sshfl [vmem:[#allocation1 + $0x8] sm:$0xff pattern:$0x73625140]
        %v1565 = vld.sshfl [vmem:[#allocation1 + $0x10] sm:$0xff pattern:$0x73625140]
        %v1566 = vld.sshfl [vmem:[#allocation1 + $0x18] sm:$0xff pattern:$0x73625140]
        %1570 = vrot.lane.b32.xlu0 %v1564, 93
        %v1571 = vpop.permute.xlu0 %1570
        %1572 = vrot.lane.b32.xlu0 %v1565, 93
        %v1573 = vpop.permute.xlu0 %1572
        %1574 = vrot.lane.b32.xlu0 %v1566, 93
        %v1575 = vpop.permute.xlu0 %1574
        %vm1576 = vcmp.lt.s32.totalorder %v299, 93
        %v1577 = vsel %vm1576, %v1573, %v1575
        %v1578 = vsel %vm1576, %v1571, %v1573
        %v1579 = vld [vmem:[#allocation4] sm:$0x3]
        %1581 = vset.pattern.permute.xlu0 41
        %1582 = vperm.xlu0 %1581, %v1579
        %v1583 = vpop.permute.xlu0 %1582
        %v1585 = vmul.f32 %v1578, %v1583
        %v1586 = vmul.f32 %v1577, %v1583
        %v1587 = vadd.f32 %v1561, %v1585
        %v1588 = vadd.f32 %v1562, %v1586
        %1589 = vst [vmem:[#allocation1] ss:$4 sm:$0xff] %v283
        %v1590 = vld.sshfl [vmem:[#allocation1 + $0x8] sm:$0xff pattern:$0x73625140]
        %v1591 = vld.sshfl [vmem:[#allocation1 + $0x10] sm:$0xff pattern:$0x73625140]
        %v1592 = vld.sshfl [vmem:[#allocation1 + $0x18] sm:$0xff pattern:$0x73625140]
        %1596 = vrot.lane.b32.xlu0 %v1590, 77
        %v1597 = vpop.permute.xlu0 %1596
        %1598 = vrot.lane.b32.xlu0 %v1591, 77
        %v1599 = vpop.permute.xlu0 %1598
        %1600 = vrot.lane.b32.xlu0 %v1592, 77
        %v1601 = vpop.permute.xlu0 %1600
        %vm1602 = vcmp.lt.s32.totalorder %v299, 77
        %v1603 = vsel %vm1602, %v1599, %v1601
        %v1604 = vsel %vm1602, %v1597, %v1599
        %v1605 = vld [vmem:[#allocation4] sm:$0x3]
        %1607 = vset.pattern.permute.xlu0 48
        %1608 = vperm.xlu0 %1607, %v1605
        %v1609 = vpop.permute.xlu0 %1608
        %v1611 = vmul.f32 %v1604, %v1609
        %v1612 = vmul.f32 %v1603, %v1609
        %v1613 = vadd.f32 %v1587, %v1611
        %v1614 = vadd.f32 %v1588, %v1612
        %s1615 = scalar_lea.vmem [#allocation7], 6
        %v1616 = vld [vmem:[%s1615] ss:$8 sm:$0x3]
        %v1618 = vperm.slane %v1616, 0
        %v1619 = vperm.slane %v1616, 1
        %v1622 = vmul.f32 %v1613, %v1618
        %v1623 = vmul.f32 %v1614, %v1619
        %v1624 = vadd.f32 %v1431, %v1622
        %v1625 = vadd.f32 %v1432, %v1623
        %v1628 = vrot.slane %v1624, 1
        %v1629 = vrot.slane %v1625, 1
        %v1632 = vadd.f32 %v1624, %v1628
        %v1633 = vadd.f32 %v1625, %v1629
        %v1634 = vxor.u32 %v1632, 2147483648
        %v1635 = vxor.u32 %v1633, 2147483648
        %v1636 = vmul.f32 %v1634, 1.442695
        %v1637 = vpow.pop %v1636
        %v1638 = vmul.f32 %v1635, 1.442695
        %v1639 = vpow.pop %v1638
        %v1640 = vadd.f32 %v1637, 1.0
        %v1641 = vadd.f32 %v1639, 1.0
        %v1642 = vrcp.pop %v1640
        %v1643 = vmul.f32 %v1640, %v1642
        %v1644 = vsub.f32 1.0, %v1643
        %v1645 = vmul.f32 %v1642, %v1644
        %v1646 = vadd.f32 %v1642, %v1645
        %vm1647 = vweird.f32 %v1640
        %vm1648 = vweird.f32 %v1642
        %vm1649 = vmor %vm1647, %vm1648
        %v1650 = vsel %vm1649, %v1642, %v1646
        %v1651 = vand.u32 2147483647, %v1640
        %vm1652 = vcmp.eq.f32.partialorder %v1651, 8.507059e+37
        %v1653 = vand.u32 %v1640, 2147483648
        %v1654 = vor.u32 1.1754944e-38, %v1653
        %v1655 = vsel %vm1652, %v1654, %v1650
        %v1656 = vmul.f32 1.0, %v1655
        %v1657 = vrcp.pop %v1641
        %v1658 = vmul.f32 %v1641, %v1657
        %v1659 = vsub.f32 1.0, %v1658
        %v1660 = vmul.f32 %v1657, %v1659
        %v1661 = vadd.f32 %v1657, %v1660
        %vm1662 = vweird.f32 %v1641
        %vm1663 = vweird.f32 %v1657
        %vm1664 = vmor %vm1662, %vm1663
        %v1665 = vsel %vm1664, %v1657, %v1661
        %v1666 = vand.u32 2147483647, %v1641
        %vm1667 = vcmp.eq.f32.partialorder %v1666, 8.507059e+37
        %v1668 = vand.u32 %v1641, 2147483648
        %v1669 = vor.u32 1.1754944e-38, %v1668
        %v1670 = vsel %vm1667, %v1669, %v1665
        %v1671 = vmul.f32 1.0, %v1670
        %v1674 = vrot.slane %v1671, 7
        %v1675 = vsel %vm247, %v1656, %v1674
        %1677 = vst.msk [vmem:[#allocation3] sm:$0x3] %vm253, %v1675
        %v1678 = vld [vmem:[#allocation3] sm:$0x3]
        %v1680 = vperm.slane %v1678, 0
        %v1681 = vperm.slane %v1678, 1
        %v1682 = vld [vmem:[%s220] sm:$0xff]
        %v1683 = vrot.slane %v1681, 4
        %v1684 = vsel %vm229, %v1680, %v1683
        %v1686 = vmul.f32 %v1682, %v1684
        %s1687 = smul.addr %s218, 4
        %s1688 = scalar_lea.vmem %s215, %s1687 [#allocation10]
        %1689 = vst [vmem:[%s1688] sm:$0xff] %v1686
        %s1690 = sand.u32 %s95, 1
        %s1691 = scalar_lea.sflag [#allocation6], %s1690
        %s1692 = sand.u32 %s95, 1
        %s1693 = smul.addr %s1692, 8
        %s1694 = scalar_lea.vmem [#allocation10], %s1693
        // Predicated region
        $region45: #{tpu_custom_call.1} parent=31 // pred_check
          %p1695 = pneg %p105
        $region46: #{tpu_custom_call.1} parent=31 // pred_check_branch
          %1697 = sbr.rel (%p1695) target = $region48
        $region47: #{tpu_custom_call.1} parent=31 // pred_region
          %1699 = vsyncadd %s1691, 0
          %s1700 = smul.addr %s19, 2
          %s1701 = smul.addr %s1700, 4
          %s1702 = scalar_lea.hbm %s3, %s1701
          %s1704 = sshll.u32 %s1694, 4
          %s1705 = int_to_ptr.vmem [resolvable:$true] %s1704
          %s1706 = sshll.u32 %s1702, 4
          %s1707 = int_to_ptr.hbm [resolvable:$true] %s1706
          %1709 = dma.vmem_to_hbm [thread:$0]  %s1705, 128, %s1707, %s1691
        $region48: #{tpu_custom_call.1} parent=31 // pred_fallthru
          _
      $region32: #{tpu_custom_call.1} parent=5 // pred_fallthru
        _
      %p1710 = scmp.le.s32.totalorder 2, %s14
      // Predicated region
      $region49: #{tpu_custom_call.1} parent=5 // pred_check
        %p1711 = pneg %p1710
      $region50: #{tpu_custom_call.1} parent=5 // pred_check_branch
        %1713 = sbr.rel (%p1711) target = $region52
      $region51: #{tpu_custom_call.1} parent=5 // pred_region
        %s1714 = ssub.s32 %s14, 2
        // Predicated region
        $region53: #{tpu_custom_call.1} parent=51 // pred_check
          %p1715 = pneg %p111
        $region54: #{tpu_custom_call.1} parent=51 // pred_check_branch
          %1717 = sbr.rel (%p1715) target = $region56
        $region55: #{tpu_custom_call.1} parent=51 // pred_region
          %s1718 = sand.u32 %s96, 1
          %s1719 = scalar_lea.sflag [#allocation6], %s1718
          %s1720 = sand.u32 %s96, 1
          %s1721 = smul.addr %s1720, 8
          %s1722 = scalar_lea.vmem [#allocation10], %s1721
          %1724 = dma.done %s1719, 128
        $region56: #{tpu_custom_call.1} parent=51 // pred_fallthru
          _
      $region52: #{tpu_custom_call.1} parent=5 // pred_fallthru
        _
    $region6: #{tpu_custom_call.1} parent=1 // loop_footer
      %s18 = sadd.s32 1, %s14
    $region7: #{tpu_custom_call.1} parent=1 // loop_footer_branch
      %13 = sbr.rel target = $region3
    $region8: #{tpu_custom_call.1} parent=1 // loop_exit
      _
    %1725 = vsyncpa [#allocation5], 1
    %s1726 = scalar_lea.sflag [#allocation5], 1
    %1727 = vsyncpa %s1726, 1
    %1728 = vsyncpa [#allocation8], 1
    %1729 = vsyncpa [#allocation6], 1
    %s1730 = scalar_lea.sflag [#allocation6], 1
    %1731 = vsyncpa %s1730, 1

</llo_original>
